<compile_context>
chip_gen: v6e
topology: v6e:2x2x1
jax: 0.10.0
libtpu: 0.0.40
codegen_flags: <defaults>
</compile_context>

<pallas_src>
import functools

import jax
import jax.numpy as jnp
from jax.experimental import pallas as pl
from jax.experimental.pallas import tpu as pltpu


# ----------------------------------------------------------------------------
# Pallas kernel: full T-step BiConvLSTMCell recurrence for one batch element.
#   grid = (N, T); h_stack/c resident in VMEM scratch across T.
#   xproj_ref : (1, 1, 4*Ch, Sp) bf16, precomputed x-projection (+bias, BN
#               folded), padded-flat spatial layout (top-left aligned).
#   wh_ref    : (T, 4*Ch, K*K*Ch) bf16, fused hidden weights (BN folded),
#               VMEM-resident (constant index_map).
#   mask_ref  : (Ch, Sp) f32, 1.0 at valid (y<H, x<W) flat positions, else 0.
#   h_out/c_out: (1, Ch, Sp) f32, written only at the last timestep.
#   hstack_ref: (K*K*Ch, Sp) bf16 scratch: the K*K lane-rolled copies of the
#               zero-padded-frame h (rows tap*Ch:(tap+1)*Ch for tap=di*K+dj).
#   c_ref     : (Ch, Sp) f32 scratch, cell state (top-left aligned layout).
# ----------------------------------------------------------------------------
def _recurrence_kernel(xproj_ref, wh_ref, mask_ref, h_out_ref, c_out_ref,
                       hstack_ref, c_ref, *, Ch, K, pad, Wp, Sp):
    t = pl.program_id(1)
    T = pl.num_programs(1)

    @pl.when(t == 0)
    def _init():
        hstack_ref[...] = jnp.zeros_like(hstack_ref)
        c_ref[...] = jnp.zeros_like(c_ref)

    # Single fused MXU matmul over the whole 3x3 receptive field:
    #   (4*Ch, K*K*Ch) x (K*K*Ch, Sp), bf16 operands, f32 accumulation.
    acc = jnp.dot(wh_ref[t], hstack_ref[...],
                  preferred_element_type=jnp.float32)            # (4*Ch, Sp)

    # Slice-wise gate epilogue (keeps live working set small; xproj is loaded
    # and upcast per gate slice instead of as a full (4*Ch, Sp) block).
    def gate_pre(g):
        x_g = xproj_ref[0, 0, g * Ch:(g + 1) * Ch, :].astype(jnp.float32)
        return acc[g * Ch:(g + 1) * Ch, :] + x_g

    def sig(x):
        # sigmoid(x) = 0.5 * tanh(0.5 * x) + 0.5  (single EUP transcendental)
        return 0.5 * jnp.tanh(0.5 * x) + 0.5

    i_g = sig(gate_pre(0))
    f_g = sig(gate_pre(1))
    o_g = sig(gate_pre(2))
    g_g = jnp.tanh(gate_pre(3))

    c_next = f_g * c_ref[...] + i_g * g_g
    h_next = o_g * jnp.tanh(c_next)
    c_ref[...] = c_next

    # Re-embed h_next into the zero-padded frame (mask invalid lanes, shift by
    # pad*(Wp+1)) and materialize all K*K lane-rolled copies for the next
    # step's fused matmul.  The two rolls are composed into one roll per tap;
    # the circular wrap only ever pulls in masked (zero) lanes (see the static
    # asserts in __main__).  Stores are bf16 (half the vst traffic).
    h_m = h_next * mask_ref[...]                                  # f32, no bcast
    for tap in range(K * K):
        di, dj = divmod(tap, K)
        shift = (pad * Wp + pad - (di * Wp + dj)) % Sp
        v = h_m if shift == 0 else pltpu.roll(h_m, shift=shift, axis=1)
        hstack_ref[tap * Ch:(tap + 1) * Ch, :] = v.astype(jnp.bfloat16)

    @pl.when(t == T - 1)
    def _write_out():
        # NOTE: padded / out-of-frame lanes of h/c hold don't-care values;
        # extract_output crops them away downstream.
        h_out_ref[0] = h_next
        c_out_ref[0] = c_next


# ----------------------------------------------------------------------------
# Wrapper: one pallas_call for the whole (batch, time) recurrence.
# ----------------------------------------------------------------------------
def biconvlstm_recurrence(xproj, wh_fused, mask, *, Wp, K):
    """xproj: (N,T,4Ch,Sp) bf16, wh_fused: (T,4Ch,K*K*Ch) bf16, mask: (Ch,Sp)."""
    N, T, C4, Sp = xproj.shape
    Ch = C4 // 4
    KKC = wh_fused.shape[-1]
    assert KKC == K * K * Ch
    pad = K // 2

    kern = functools.partial(_recurrence_kernel, Ch=Ch, K=K, pad=pad, Wp=Wp, Sp=Sp)

    h_out, c_out = pl.pallas_call(
        kern,
        out_shape=(jax.ShapeDtypeStruct((N, Ch, Sp), jnp.float32),
                   jax.ShapeDtypeStruct((N, Ch, Sp), jnp.float32)),
        grid_spec=pltpu.PrefetchScalarGridSpec(
            num_scalar_prefetch=0,
            grid=(N, T),
            in_specs=[
                # per (n, t) x-projection block — the only per-step stream.
                pl.BlockSpec((1, 1, C4, Sp), lambda n, t: (n, t, 0, 0)),
                # all hidden weights, constant index_map -> DMA'd once, resident.
                pl.BlockSpec((T, C4, KKC), lambda n, t: (0, 0, 0)),
                # pre-broadcast validity mask, resident.
                pl.BlockSpec((Ch, Sp), lambda n, t: (0, 0)),
            ],
            out_specs=[
                pl.BlockSpec((1, Ch, Sp), lambda n, t: (n, 0, 0)),
                pl.BlockSpec((1, Ch, Sp), lambda n, t: (n, 0, 0)),
            ],
            scratch_shapes=[
                pltpu.VMEM((K * K * Ch, Sp), jnp.bfloat16),  # rolled h stack
                pltpu.VMEM((Ch, Sp), jnp.float32),           # c state
            ],
        ),
        # On v7x (2 TCs) the batch axis could be pltpu.CORE_PARALLEL to put one
        # batch element on each TensorCore; plain "parallel" kept for
        # portability across v5e/v6e.
        compiler_params=pltpu.CompilerParams(
            dimension_semantics=("parallel", "arbitrary")),
    )(xproj, wh_fused, mask)
    return h_out, c_out


# ----------------------------------------------------------------------------
# Parameter init (mirrors BiConvLSTMCell.__init__ shapes, one cell per step).
# ----------------------------------------------------------------------------
def init_params(key, T, Cin, Ch, K):
    keys = jax.random.split(key, 6 * T)
    eps = 1e-5
    ws, bs, scales, shifts = [], [], [], []
    for t in range(T):
        kw, kb, kg, kbe, km, kv = keys[6 * t:6 * t + 6]
        # PyTorch conv weight is (4*Ch, Cin+Ch, K, K); stored here as HWIO.
        w = jax.random.normal(kw, (K, K, Cin + Ch, 4 * Ch), jnp.float32) * 0.05
        b = jax.random.normal(kb, (4 * Ch,), jnp.float32) * 0.05
        # BatchNorm2d(4*Ch) inference stats (randomized to exercise the fold).
        gamma = 1.0 + 0.1 * jax.random.normal(kg, (4 * Ch,), jnp.float32)
        beta = 0.1 * jax.random.normal(kbe, (4 * Ch,), jnp.float32)
        r_mean = 0.1 * jax.random.normal(km, (4 * Ch,), jnp.float32)
        r_var = jax.random.uniform(kv, (4 * Ch,), jnp.float32, minval=0.5, maxval=1.5)
        scale = gamma / jnp.sqrt(r_var + eps)
        shift = beta - r_mean * scale
        ws.append(w); bs.append(b); scales.append(scale); shifts.append(shift)
    # NOTE: conv_concat in BiConvLSTMCell.__init__ is never used in its forward.
    return {"w": jnp.stack(ws), "b": jnp.stack(bs),
            "bn_scale": jnp.stack(scales), "bn_shift": jnp.stack(shifts)}


def fold_params(p, Cin, Ch, K):
    """Fold inference BatchNorm into conv weights/bias; split x/h paths.

    h-path weights are returned in the fused, lane-dense MXU layout
    (T, 4*Ch, K*K*Ch) with contraction index tap*Ch + hidden_channel
    (tap = di*K + dj), stored as bf16.
    """
    w, b = p["w"], p["b"]                               # (T,K,K,Cin+Ch,4Ch), (T,4Ch)
    scale, shift = p["bn_scale"], p["bn_shift"]         # (T,4Ch)
    T = w.shape[0]
    w_f = w * scale[:, None, None, None, :]
    wx = w_f[:, :, :, :Cin, :]                          # (T,K,K,Cin,4Ch)  HWIO, f32
    wh = w_f[:, :, :, Cin:, :]                          # (T,K,K,Ch,4Ch)
    wh_fused = jnp.transpose(wh, (0, 4, 1, 2, 3)).reshape(T, 4 * Ch, K * K * Ch)
    wh_fused = wh_fused.astype(jnp.bfloat16)
    bias = b * scale + shift                            # (T,4Ch)
    return wx, wh_fused, bias


# ----------------------------------------------------------------------------
# Wrapper glue: precompute x projection for all timesteps, padded-flat layout.
# ----------------------------------------------------------------------------
def precompute_input_projection(x_seq, wx, bias, Hp, Wp, Sp):
    """x_seq: (N,T,H,W,Cin) -> (N,T,4Ch,Sp) bf16 with bias & BN folded in."""
    def one_t(x_t, w_t, b_t):
        y = jax.lax.conv_general_dilated(
            x_t, w_t, window_strides=(1, 1), padding="SAME",
            dimension_numbers=("NHWC", "HWIO", "NHWC"))
        return y + b_t
    xp = jax.vmap(one_t, in_axes=(1, 0, 0), out_axes=1)(x_seq, wx, bias)
    N, T, H, W, C4 = xp.shape
    xp = jnp.pad(xp, ((0, 0), (0, 0), (0, Hp - H), (0, Wp - W), (0, 0)))
    xp = jnp.transpose(xp, (0, 1, 4, 2, 3)).reshape(N, T, C4, Hp * Wp)
    xp = jnp.pad(xp, ((0, 0), (0, 0), (0, 0), (0, Sp - Hp * Wp)))
    return xp.astype(jnp.bfloat16)


def make_valid_mask(H, W, Hp, Wp, Sp, Ch):
    rows = jnp.arange(Hp * Wp) // Wp
    cols = jnp.arange(Hp * Wp) % Wp
    m = ((rows < H) & (cols < W)).astype(jnp.float32)
    m = jnp.pad(m, (0, Sp - Hp * Wp))
    # Pre-broadcast over hidden channels so the kernel never broadcasts per step.
    return jnp.broadcast_to(m[None, :], (Ch, Sp))


def extract_output(y, H, W, Hp, Wp):
    """(N,Ch,Sp) padded-flat, top-left aligned -> (N,H,W,Ch) NHWC."""
    N, Ch, _ = y.shape
    y = y[:, :, :Hp * Wp].reshape(N, Ch, Hp, Wp)[:, :, :H, :W]
    return jnp.transpose(y, (0, 2, 3, 1))


# ----------------------------------------------------------------------------
# Pure-JAX reference (lax conv, unfolded BN, f32) for correctness checking.
# ----------------------------------------------------------------------------
def reference_forward(x_seq, p, Ch):
    N, T, H, W, _ = x_seq.shape
    h = jnp.zeros((N, H, W, Ch), jnp.float32)
    c = jnp.zeros((N, H, W, Ch), jnp.float32)
    for t in range(T):
        comb = jnp.concatenate([x_seq[:, t], h], axis=-1)
        conv = jax.lax.conv_general_dilated(
            comb, p["w"][t], window_strides=(1, 1), padding="SAME",
            dimension_numbers=("NHWC", "HWIO", "NHWC"))
        conv = conv + p["b"][t]
        conv = conv * p["bn_scale"][t] + p["bn_shift"][t]
        i = jax.nn.sigmoid(conv[..., 0 * Ch:1 * Ch])
        f = jax.nn.sigmoid(conv[..., 1 * Ch:2 * Ch])
        o = jax.nn.sigmoid(conv[..., 2 * Ch:3 * Ch])
        g = jnp.tanh(conv[..., 3 * Ch:4 * Ch])
        c = f * c + i * g
        h = o * jnp.tanh(c)
    return h, c


def _clamped_sigmoid(x):
    # BiConvLSTM._sigmoid; in the original it is applied to DLASeg head outputs.
    return jnp.clip(jax.nn.sigmoid(x), 1e-4, 1.0 - 1e-4)


if __name__ == "__main__":
    # Small shapes consistent with the module: batch=2, input_dim=4,
    # hidden_dim=32, spatial 16x16, kernel_size=3, sq_len=4 cells.
    N, T, Cin, Ch, H, W, K = 2, 4, 4, 32, 16, 16, 3
    pad = K // 2
    Hp, Wp = H + 2 * pad, W + 2 * pad
    S = Hp * Wp
    Sp = ((S + 127) // 128) * 128               # lane-dense padded-flat length

    # Static invariants of the roll-based padded-frame scheme (so a future
    # shape change can't silently corrupt the circular-wrap reasoning):
    assert Hp * Wp <= Sp
    # tap reads from valid output positions stay inside the padded frame:
    assert (H + K - 2) * Wp + (W + K - 2) < Hp * Wp
    # negative-offset reads wrap only into guaranteed-zero pad lanes:
    assert Sp >= Hp * Wp + pad * Wp + pad

    key = jax.random.PRNGKey(0)
    kx, kp = jax.random.split(key)
    # PyTorch-style input sequence (N, T, C, H, W) -> NHWC per step.
    x_seq_nchw = jax.random.normal(kx, (N, T, Cin, H, W), jnp.float32)
    x_seq = jnp.transpose(x_seq_nchw, (0, 1, 3, 4, 2))   # (N, T, H, W, Cin)

    params = init_params(kp, T, Cin, Ch, K)
    wx, wh_fused, bias = fold_params(params, Cin, Ch, K)

    xproj = precompute_input_projection(x_seq, wx, bias, Hp, Wp, Sp)
    mask = make_valid_mask(H, W, Hp, Wp, Sp, Ch)

    h_flat, c_flat = biconvlstm_recurrence(xproj, wh_fused, mask, Wp=Wp, K=K)
    h_flat = jax.block_until_ready(h_flat)
    c_flat = jax.block_until_ready(c_flat)

    h = extract_output(h_flat, H, W, Hp, Wp)
    c = extract_output(c_flat, H, W, Hp, Wp)

    h_exp, c_exp = reference_forward(x_seq, params, Ch)

    assert h.shape == (N, H, W, Ch) and c.shape == (N, H, W, Ch)
    # bf16 matmul operands / bf16 xproj vs. f32 reference -> ~1e-2 tolerance
    # (gate math and MXU accumulation stay f32).
    assert jnp.allclose(h, h_exp, atol=1.5e-2, rtol=1.5e-2), "h mismatch vs reference"
    assert jnp.allclose(c, c_exp, atol=1.5e-2, rtol=1.5e-2), "c mismatch vs reference"

    print("KERNEL_OK")
</pallas_src>

<mosaic_0001>
module attributes {stable_mosaic.version = 11 : i64} {
  func.func @_recurrence_kernel(%arg0: i32, %arg1: i32, %arg2: memref<1x1x128x384xbf16, #tpu.memory_space<vmem>>, %arg3: memref<4x128x288xbf16, #tpu.memory_space<vmem>>, %arg4: memref<32x384xf32, #tpu.memory_space<vmem>>, %arg5: memref<1x32x384xf32, #tpu.memory_space<vmem>>, %arg6: memref<1x32x384xf32, #tpu.memory_space<vmem>>, %arg7: memref<288x384xbf16, #tpu.memory_space<vmem>>, %arg8: memref<32x384xf32, #tpu.memory_space<vmem>>) attributes {dimension_semantics = [#tpu.dimension_semantics<parallel>, #tpu.dimension_semantics<arbitrary>], iteration_bounds = array<i64: 2, 4>, scalar_prefetch = 0 : i64, scratch_operands = 2 : i64, tpu.core_type = #tpu.core_type<tc>, window_params = [{transform_indices = @transform_0, window_bounds = array<i64: 1, 1, 128, 384>}, {pipeline_mode = #tpu.pipeline_mode<synchronous>, transform_indices = @transform_1, window_bounds = array<i64: 4, 128, 288>}, {pipeline_mode = #tpu.pipeline_mode<synchronous>, transform_indices = @transform_2, window_bounds = array<i64: 32, 384>}, {transform_indices = @transform_3, window_bounds = array<i64: 1, 32, 384>}, {transform_indices = @transform_4, window_bounds = array<i64: 1, 32, 384>}]} {
    %c0_i32 = arith.constant 0 : i32
    %0 = arith.cmpi eq, %arg1, %c0_i32 : i32
    %1 = arith.extui %0 : i1 to i32
    %c0_i32_0 = arith.constant 0 : i32
    %2 = arith.cmpi ne, %1, %c0_i32_0 : i32
    scf.if %2 {
      %cst_46 = arith.constant 0.000000e+00 : bf16
      %88 = vector.broadcast %cst_46 : bf16 to vector<288x384xbf16>
      %c0_47 = arith.constant 0 : index
      %c0_48 = arith.constant 0 : index
      %89 = vector.load %arg7[%c0_47, %c0_48] : memref<288x384xbf16, #tpu.memory_space<vmem>>, vector<288x384xbf16>
      tpu.vector_store %arg7[%c0_47, %c0_48], %88 {strides = array<i32>} : memref<288x384xbf16, #tpu.memory_space<vmem>>, vector<288x384xbf16>,
      %cst_49 = arith.constant 0.000000e+00 : f32
      %90 = vector.broadcast %cst_49 : f32 to vector<32x384xf32>
      %c0_50 = arith.constant 0 : index
      %c0_51 = arith.constant 0 : index
      %91 = vector.load %arg8[%c0_50, %c0_51] : memref<32x384xf32, #tpu.memory_space<vmem>>, vector<32x384xf32>
      tpu.vector_store %arg8[%c0_50, %c0_51], %90 {strides = array<i32>} : memref<32x384xf32, #tpu.memory_space<vmem>>, vector<32x384xf32>,
    } else {
    }
    %3 = arith.index_cast %arg1 : i32 to index
    %c0 = arith.constant 0 : index
    %c0_1 = arith.constant 0 : index
    %4 = vector.load %arg3[%3, %c0, %c0_1] : memref<4x128x288xbf16, #tpu.memory_space<vmem>>, vector<1x128x288xbf16>
    %5 = vector.shape_cast %4 : vector<1x128x288xbf16> to vector<128x288xbf16>
    %c0_2 = arith.constant 0 : index
    %c0_3 = arith.constant 0 : index
    %6 = vector.load %arg7[%c0_2, %c0_3] : memref<288x384xbf16, #tpu.memory_space<vmem>>, vector<288x384xbf16>
    %cst = arith.constant dense<0.000000e+00> : vector<128x384xf32>
    %7 = tpu.matmul %5, %6, %cst {dimension_numbers = #tpu.dot_dimension_numbers<[1], [0], [0], [1], [0, 0, 1, 1], [], []>} : vector<128x288xbf16>, vector<288x384xbf16>, vector<128x384xf32> -> vector<128x384xf32>
    %c0_4 = arith.constant 0 : index
    %c0_5 = arith.constant 0 : index
    %c0_6 = arith.constant 0 : index
    %c0_7 = arith.constant 0 : index
    %8 = vector.load %arg2[%c0_4, %c0_5, %c0_6, %c0_7] : memref<1x1x128x384xbf16, #tpu.memory_space<vmem>>, vector<1x1x32x384xbf16>
    %9 = vector.shape_cast %8 : vector<1x1x32x384xbf16> to vector<32x384xbf16>
    %10 = arith.extf %9 : vector<32x384xbf16> to vector<32x384xf32>
    %11 = vector.extract_strided_slice %7 {offsets = [0, 0], sizes = [32, 384], strides = [1, 1]} : vector<128x384xf32> to vector<32x384xf32>
    %12 = arith.addf %11, %10 : vector<32x384xf32>
    %cst_8 = arith.constant 5.000000e-01 : f32
    %13 = vector.broadcast %cst_8 : f32 to vector<32x384xf32>
    %14 = arith.mulf %13, %12 : vector<32x384xf32>
    %15 = math.tanh %14 : vector<32x384xf32>
    %cst_9 = arith.constant 5.000000e-01 : f32
    %16 = vector.broadcast %cst_9 : f32 to vector<32x384xf32>
    %17 = arith.mulf %16, %15 : vector<32x384xf32>
    %cst_10 = arith.constant 5.000000e-01 : f32
    %18 = vector.broadcast %cst_10 : f32 to vector<32x384xf32>
    %19 = arith.addf %17, %18 : vector<32x384xf32>
    %c0_11 = arith.constant 0 : index
    %c0_12 = arith.constant 0 : index
    %c32 = arith.constant 32 : index
    %c0_13 = arith.constant 0 : index
    %20 = vector.load %arg2[%c0_11, %c0_12, %c32, %c0_13] : memref<1x1x128x384xbf16, #tpu.memory_space<vmem>>, vector<1x1x32x384xbf16>
    %21 = vector.shape_cast %20 : vector<1x1x32x384xbf16> to vector<32x384xbf16>
    %22 = arith.extf %21 : vector<32x384xbf16> to vector<32x384xf32>
    %23 = vector.extract_strided_slice %7 {offsets = [32, 0], sizes = [32, 384], strides = [1, 1]} : vector<128x384xf32> to vector<32x384xf32>
    %24 = arith.addf %23, %22 : vector<32x384xf32>
    %cst_14 = arith.constant 5.000000e-01 : f32
    %25 = vector.broadcast %cst_14 : f32 to vector<32x384xf32>
    %26 = arith.mulf %25, %24 : vector<32x384xf32>
    %27 = math.tanh %26 : vector<32x384xf32>
    %cst_15 = arith.constant 5.000000e-01 : f32
    %28 = vector.broadcast %cst_15 : f32 to vector<32x384xf32>
    %29 = arith.mulf %28, %27 : vector<32x384xf32>
    %cst_16 = arith.constant 5.000000e-01 : f32
    %30 = vector.broadcast %cst_16 : f32 to vector<32x384xf32>
    %31 = arith.addf %29, %30 : vector<32x384xf32>
    %c0_17 = arith.constant 0 : index
    %c0_18 = arith.constant 0 : index
    %c64 = arith.constant 64 : index
    %c0_19 = arith.constant 0 : index
    %32 = vector.load %arg2[%c0_17, %c0_18, %c64, %c0_19] : memref<1x1x128x384xbf16, #tpu.memory_space<vmem>>, vector<1x1x32x384xbf16>
    %33 = vector.shape_cast %32 : vector<1x1x32x384xbf16> to vector<32x384xbf16>
    %34 = arith.extf %33 : vector<32x384xbf16> to vector<32x384xf32>
    %35 = vector.extract_strided_slice %7 {offsets = [64, 0], sizes = [32, 384], strides = [1, 1]} : vector<128x384xf32> to vector<32x384xf32>
    %36 = arith.addf %35, %34 : vector<32x384xf32>
    %cst_20 = arith.constant 5.000000e-01 : f32
    %37 = vector.broadcast %cst_20 : f32 to vector<32x384xf32>
    %38 = arith.mulf %37, %36 : vector<32x384xf32>
    %39 = math.tanh %38 : vector<32x384xf32>
    %cst_21 = arith.constant 5.000000e-01 : f32
    %40 = vector.broadcast %cst_21 : f32 to vector<32x384xf32>
    %41 = arith.mulf %40, %39 : vector<32x384xf32>
    %cst_22 = arith.constant 5.000000e-01 : f32
    %42 = vector.broadcast %cst_22 : f32 to vector<32x384xf32>
    %43 = arith.addf %41, %42 : vector<32x384xf32>
    %c0_23 = arith.constant 0 : index
    %c0_24 = arith.constant 0 : index
    %c96 = arith.constant 96 : index
    %c0_25 = arith.constant 0 : index
    %44 = vector.load %arg2[%c0_23, %c0_24, %c96, %c0_25] : memref<1x1x128x384xbf16, #tpu.memory_space<vmem>>, vector<1x1x32x384xbf16>
    %45 = vector.shape_cast %44 : vector<1x1x32x384xbf16> to vector<32x384xbf16>
    %46 = arith.extf %45 : vector<32x384xbf16> to vector<32x384xf32>
    %47 = vector.extract_strided_slice %7 {offsets = [96, 0], sizes = [32, 384], strides = [1, 1]} : vector<128x384xf32> to vector<32x384xf32>
    %48 = arith.addf %47, %46 : vector<32x384xf32>
    %49 = math.tanh %48 : vector<32x384xf32>
    %c0_26 = arith.constant 0 : index
    %c0_27 = arith.constant 0 : index
    %50 = vector.load %arg8[%c0_26, %c0_27] : memref<32x384xf32, #tpu.memory_space<vmem>>, vector<32x384xf32>
    %51 = arith.mulf %31, %50 : vector<32x384xf32>
    %52 = arith.mulf %19, %49 : vector<32x384xf32>
    %53 = arith.addf %51, %52 : vector<32x384xf32>
    %54 = math.tanh %53 : vector<32x384xf32>
    %55 = arith.mulf %43, %54 : vector<32x384xf32>
    %c0_28 = arith.constant 0 : index
    %c0_29 = arith.constant 0 : index
    %56 = vector.load %arg8[%c0_28, %c0_29] : memref<32x384xf32, #tpu.memory_space<vmem>>, vector<32x384xf32>
    tpu.vector_store %arg8[%c0_28, %c0_29], %53 {strides = array<i32>} : memref<32x384xf32, #tpu.memory_space<vmem>>, vector<32x384xf32>,
    %c0_30 = arith.constant 0 : index
    %c0_31 = arith.constant 0 : index
    %57 = vector.load %arg4[%c0_30, %c0_31] : memref<32x384xf32, #tpu.memory_space<vmem>>, vector<32x384xf32>
    %58 = arith.mulf %55, %57 : vector<32x384xf32>
    %c19_i32 = arith.constant 19 : i32
    %59 = tpu.dynamic_rotate %58 by %c19_i32 dim 1 : vector<32x384xf32>, i32 -> vector<32x384xf32>
    %60 = arith.truncf %59 : vector<32x384xf32> to vector<32x384xbf16>
    %c0_32 = arith.constant 0 : index
    %c0_33 = arith.constant 0 : index
    %61 = vector.load %arg7[%c0_32, %c0_33] : memref<288x384xbf16, #tpu.memory_space<vmem>>, vector<32x384xbf16>
    tpu.vector_store %arg7[%c0_32, %c0_33], %60 {strides = array<i32>} : memref<288x384xbf16, #tpu.memory_space<vmem>>, vector<32x384xbf16>,
    %c18_i32 = arith.constant 18 : i32
    %62 = tpu.dynamic_rotate %58 by %c18_i32 dim 1 : vector<32x384xf32>, i32 -> vector<32x384xf32>
    %63 = arith.truncf %62 : vector<32x384xf32> to vector<32x384xbf16>
    %c32_34 = arith.constant 32 : index
    %c0_35 = arith.constant 0 : index
    %64 = vector.load %arg7[%c32_34, %c0_35] : memref<288x384xbf16, #tpu.memory_space<vmem>>, vector<32x384xbf16>
    tpu.vector_store %arg7[%c32_34, %c0_35], %63 {strides = array<i32>} : memref<288x384xbf16, #tpu.memory_space<vmem>>, vector<32x384xbf16>,
    %c17_i32 = arith.constant 17 : i32
    %65 = tpu.dynamic_rotate %58 by %c17_i32 dim 1 : vector<32x384xf32>, i32 -> vector<32x384xf32>
    %66 = arith.truncf %65 : vector<32x384xf32> to vector<32x384xbf16>
    %c64_36 = arith.constant 64 : index
    %c0_37 = arith.constant 0 : index
    %67 = vector.load %arg7[%c64_36, %c0_37] : memref<288x384xbf16, #tpu.memory_space<vmem>>, vector<32x384xbf16>
    tpu.vector_store %arg7[%c64_36, %c0_37], %66 {strides = array<i32>} : memref<288x384xbf16, #tpu.memory_space<vmem>>, vector<32x384xbf16>,
    %c1_i32 = arith.constant 1 : i32
    %68 = tpu.dynamic_rotate %58 by %c1_i32 dim 1 : vector<32x384xf32>, i32 -> vector<32x384xf32>
    %69 = arith.truncf %68 : vector<32x384xf32> to vector<32x384xbf16>
    %c96_38 = arith.constant 96 : index
    %c0_39 = arith.constant 0 : index
    %70 = vector.load %arg7[%c96_38, %c0_39] : memref<288x384xbf16, #tpu.memory_space<vmem>>, vector<32x384xbf16>
    tpu.vector_store %arg7[%c96_38, %c0_39], %69 {strides = array<i32>} : memref<288x384xbf16, #tpu.memory_space<vmem>>, vector<32x384xbf16>,
    %71 = arith.truncf %58 : vector<32x384xf32> to vector<32x384xbf16>
    %c128 = arith.constant 128 : index
    %c0_40 = arith.constant 0 : index
    %72 = vector.load %arg7[%c128, %c0_40] : memref<288x384xbf16, #tpu.memory_space<vmem>>, vector<32x384xbf16>
    tpu.vector_store %arg7[%c128, %c0_40], %71 {strides = array<i32>} : memref<288x384xbf16, #tpu.memory_space<vmem>>, vector<32x384xbf16>,
    %c383_i32 = arith.constant 383 : i32
    %73 = tpu.dynamic_rotate %58 by %c383_i32 dim 1 : vector<32x384xf32>, i32 -> vector<32x384xf32>
    %74 = arith.truncf %73 : vector<32x384xf32> to vector<32x384xbf16>
    %c160 = arith.constant 160 : index
    %c0_41 = arith.constant 0 : index
    %75 = vector.load %arg7[%c160, %c0_41] : memref<288x384xbf16, #tpu.memory_space<vmem>>, vector<32x384xbf16>
    tpu.vector_store %arg7[%c160, %c0_41], %74 {strides = array<i32>} : memref<288x384xbf16, #tpu.memory_space<vmem>>, vector<32x384xbf16>,
    %c367_i32 = arith.constant 367 : i32
    %76 = tpu.dynamic_rotate %58 by %c367_i32 dim 1 : vector<32x384xf32>, i32 -> vector<32x384xf32>
    %77 = arith.truncf %76 : vector<32x384xf32> to vector<32x384xbf16>
    %c192 = arith.constant 192 : index
    %c0_42 = arith.constant 0 : index
    %78 = vector.load %arg7[%c192, %c0_42] : memref<288x384xbf16, #tpu.memory_space<vmem>>, vector<32x384xbf16>
    tpu.vector_store %arg7[%c192, %c0_42], %77 {strides = array<i32>} : memref<288x384xbf16, #tpu.memory_space<vmem>>, vector<32x384xbf16>,
    %c366_i32 = arith.constant 366 : i32
    %79 = tpu.dynamic_rotate %58 by %c366_i32 dim 1 : vector<32x384xf32>, i32 -> vector<32x384xf32>
    %80 = arith.truncf %79 : vector<32x384xf32> to vector<32x384xbf16>
    %c224 = arith.constant 224 : index
    %c0_43 = arith.constant 0 : index
    %81 = vector.load %arg7[%c224, %c0_43] : memref<288x384xbf16, #tpu.memory_space<vmem>>, vector<32x384xbf16>
    tpu.vector_store %arg7[%c224, %c0_43], %80 {strides = array<i32>} : memref<288x384xbf16, #tpu.memory_space<vmem>>, vector<32x384xbf16>,
    %c365_i32 = arith.constant 365 : i32
    %82 = tpu.dynamic_rotate %58 by %c365_i32 dim 1 : vector<32x384xf32>, i32 -> vector<32x384xf32>
    %83 = arith.truncf %82 : vector<32x384xf32> to vector<32x384xbf16>
    %c256 = arith.constant 256 : index
    %c0_44 = arith.constant 0 : index
    %84 = vector.load %arg7[%c256, %c0_44] : memref<288x384xbf16, #tpu.memory_space<vmem>>, vector<32x384xbf16>
    tpu.vector_store %arg7[%c256, %c0_44], %83 {strides = array<i32>} : memref<288x384xbf16, #tpu.memory_space<vmem>>, vector<32x384xbf16>,
    %c3_i32 = arith.constant 3 : i32
    %85 = arith.cmpi eq, %arg1, %c3_i32 : i32
    %86 = arith.extui %85 : i1 to i32
    %c0_i32_45 = arith.constant 0 : i32
    %87 = arith.cmpi ne, %86, %c0_i32_45 : i32
    scf.if %87 {
      %c0_46 = arith.constant 0 : index
      %c0_47 = arith.constant 0 : index
      %c0_48 = arith.constant 0 : index
      %88 = vector.load %arg5[%c0_46, %c0_47, %c0_48] : memref<1x32x384xf32, #tpu.memory_space<vmem>>, vector<1x32x384xf32>
      %89 = vector.shape_cast %88 : vector<1x32x384xf32> to vector<32x384xf32>
      %90 = vector.shape_cast %55 : vector<32x384xf32> to vector<1x32x384xf32>
      tpu.vector_store %arg5[%c0_46, %c0_47, %c0_48], %90 {strides = array<i32>} : memref<1x32x384xf32, #tpu.memory_space<vmem>>, vector<1x32x384xf32>,
      %c0_49 = arith.constant 0 : index
      %c0_50 = arith.constant 0 : index
      %c0_51 = arith.constant 0 : index
      %91 = vector.load %arg6[%c0_49, %c0_50, %c0_51] : memref<1x32x384xf32, #tpu.memory_space<vmem>>, vector<1x32x384xf32>
      %92 = vector.shape_cast %91 : vector<1x32x384xf32> to vector<32x384xf32>
      %93 = vector.shape_cast %53 : vector<32x384xf32> to vector<1x32x384xf32>
      tpu.vector_store %arg6[%c0_49, %c0_50, %c0_51], %93 {strides = array<i32>} : memref<1x32x384xf32, #tpu.memory_space<vmem>>, vector<1x32x384xf32>,
    } else {
    }
    return
  }
  func.func @transform_0(%arg0: i32, %arg1: i32) -> (i32, i32, i32, i32) {
    %c0_i32 = arith.constant 0 : i32
    %c0_i32_0 = arith.constant 0 : i32
    %c0_i32_1 = arith.constant 0 : i32
    return %arg0, %arg1, %c0_i32, %c0_i32_0 : i32, i32, i32, i32
  }
  func.func @transform_1(%arg0: i32, %arg1: i32) -> (i32, i32, i32) {
    %c0_i32 = arith.constant 0 : i32
    %c0_i32_0 = arith.constant 0 : i32
    %c0_i32_1 = arith.constant 0 : i32
    %c0_i32_2 = arith.constant 0 : i32
    return %c0_i32, %c0_i32_0, %c0_i32_1 : i32, i32, i32
  }
  func.func @transform_2(%arg0: i32, %arg1: i32) -> (i32, i32) {
    %c0_i32 = arith.constant 0 : i32
    %c0_i32_0 = arith.constant 0 : i32
    %c0_i32_1 = arith.constant 0 : i32
    return %c0_i32, %c0_i32_0 : i32, i32
  }
  func.func @transform_3(%arg0: i32, %arg1: i32) -> (i32, i32, i32) {
    %c0_i32 = arith.constant 0 : i32
    %c0_i32_0 = arith.constant 0 : i32
    %c0_i32_1 = arith.constant 0 : i32
    return %arg0, %c0_i32, %c0_i32_0 : i32, i32, i32
  }
  func.func @transform_4(%arg0: i32, %arg1: i32) -> (i32, i32, i32) {
    %c0_i32 = arith.constant 0 : i32
    %c0_i32_0 = arith.constant 0 : i32
    %c0_i32_1 = arith.constant 0 : i32
    return %arg0, %c0_i32, %c0_i32_0 : i32, i32, i32
  }
}

</mosaic_0001>

<llo_original>
// kernel: tpu_custom_call.1
$region0: #{tpu_custom_call.1}
  #allocation0 [shape = 'u32[]', space=smem, size = 0x4, offset = 0x4, fixed_abs, tag = 'smem constant byte address 0x4 - core index']
  #allocation1 [shape = 'u32[144,128]{1,0:T(1,128)}', space=vmem, size = 0x12000, scoped, tag = 'internal scratch']
  #allocation2 [shape = 'bf16[288,384]{1,0:T(8,128)(2,1)}', space=vmem, size = 0x36000, scoped, tag = 'scratch operand']
  #allocation3 [shape = 'f32[32,384]{1,0:T(8,128)}', space=vmem, size = 0xc000, scoped, tag = 'scratch operand']
  %s0 = inlined_call_operand.hbm [shape: bf16[2,4,128,384], index: 0, kind: input, shape index: {}]
  %s1 = inlined_call_operand.vmem [shape: bf16[4,128,288], index: 1, kind: input, shape index: {}]
  %s2 = inlined_call_operand.vmem [shape: f32[32,384], index: 2, kind: input, shape index: {}]
  %s3 = inlined_call_operand.hbm [shape: f32[2,32,384], index: 3, kind: output, shape index: {0}]
  %s4 = inlined_call_operand.hbm [shape: f32[2,32,384], index: 4, kind: output, shape index: {1}]
  %5 = xla_tuple %s3, %s4
  %s6 = sld [smem:[#allocation0]]
  $region65: #{tpu_custom_call.1} parent=0
    _
  %s8 = ssub.s32 1, %s6
  %s9 = scalar_select 0, %s8, %s6
  $region1: #{tpu_custom_call.1} parent=0
    #allocation4 [shape = 'u8[196608]{0}', space=vmem, size = 0x30000, scoped, tag = 'input window, operand 0']
    #allocation5 [shape = 's32[2]{0}', space=sflag, size = 0x8, scoped, tag = 'scoped memory for tpu_custom_call.1']
    #allocation6 [shape = 's32[2]{0}', space=sflag, size = 0x8, scoped, tag = 'scoped memory for tpu_custom_call.1']
    #allocation7 [shape = 'u8[98304]{0}', space=vmem, size = 0x18000, scoped, tag = 'output window, operand 0']
    #allocation8 [shape = 'u8[98304]{0}', space=vmem, size = 0x18000, scoped, tag = 'output window, operand 1']
    #allocation9 [shape = 's32[2]{0}', space=sflag, size = 0x8, scoped, tag = 'scoped memory for tpu_custom_call.1']
    %10 = vsyncpa [#allocation5], 0
    %s11 = scalar_lea.sflag [#allocation5], 1
    %12 = vsyncpa %s11, 0
    %13 = vsyncpa [#allocation6], 0
    %s14 = scalar_lea.sflag [#allocation6], 1
    %15 = vsyncpa %s14, 0
    %16 = vsyncpa [#allocation9], 0
    %s17 = scalar_lea.sflag [#allocation9], 1
    %18 = vsyncpa %s17, 0
    loop: start=0, step=1, limit=10
    $region2: #{tpu_custom_call.1} parent=1 // loop_pre_header
      _
    $region3: #{tpu_custom_call.1} parent=1 // loop_header
      %s20 = sphi 0, %s24
      %p21 = scmp.ge.s32.totalorder %s20, 10
      %s27 = sphi 0, %s39
      %s28 = sphi 0, %s35
      %s29 = sphi 0, %s27
      %s30 = sphi 0, %s28
      %s31 = sphi 0, %s29
      %s32 = sphi 0, %s30
      %s44 = sphi 0, %s46
      %s47 = sphi 0, %s44
      %s48 = sphi 0, %s47
      %s64 = sphi 0, %s48
      %s68 = sphi 0, %s68
      %s70 = sphi 0, %s68
      %s71 = sphi 0, %s70
      %s85 = sphi 0, %s71
      %s89 = sphi 0, %s89
      %s91 = sphi 0, %s89
      %s92 = sphi 0, %s91
      %s106 = sphi 0, %s92
      %s112 = sphi 0, %s114
      %s115 = sphi 0, %s112
      %s116 = sphi 0, %s115
      %s132 = sphi 0, %s116
      %s138 = sphi 0, %s140
      %s141 = sphi 0, %s138
      %s142 = sphi 0, %s141
      %s158 = sphi 0, %s142
    $region4: #{tpu_custom_call.1} parent=1 // loop_header_branch
      %23 = sbr.rel (%p21) target = $region8
    $region5: #{tpu_custom_call.1} parent=1 // loop_body
      %s25 = ssub.s32 %s20, 1
      %s26 = ssub.s32 %s20, 2
      %s33 = sadd.s32 1, %s28
      %p34 = scmp.ge.s32.totalorder %s33, 4
      %s35 = scalar_select %p34, 0, %s33
      %s36 = sadd.s32 1, %s27
      %s37 = scalar_select %p34, %s36, %s27
      %p38 = scmp.ge.s32.totalorder %s37, 2
      %s39 = scalar_select %p38, 0, %s37
      %s40 = ssub.s32 %s27, %s39
      %s41 = ssub.s32 %s28, %s35
      %s42 = sor.u32 %s40, %s41
      %p43 = scmp.eq.s32.totalorder %s42, 0
      %s45 = sadd.s32 %s44, 1
      %s46 = scalar_select %p43, %s44, %s45
      %p49 = pneg %p43
      %p50 = scmp.eq.s32.totalorder %s20, 7
      %p51 = por %p49, %p50
      %p52 = scmp.ne.s32.totalorder %s44, %s47
      %p53 = scmp.eq.s32.totalorder %s20, 0
      %p54 = por %p52, %p53
      %p55 = scmp.ne.s32.totalorder %s44, %s47
      %p56 = scmp.eq.s32.totalorder %s25, 7
      %p57 = por %p55, %p56
      %p58 = scmp.ne.s32.totalorder %s47, %s48
      %p59 = scmp.eq.s32.totalorder %s25, 0
      %p60 = por %p58, %p59
      %p61 = scmp.ne.s32.totalorder %s47, %s48
      %p62 = scmp.eq.s32.totalorder %s26, 7
      %p63 = por %p61, %p62
      %p65 = scmp.ne.s32.totalorder %s48, %s64
      %p66 = scmp.eq.s32.totalorder %s26, 0
      %p67 = por %p65, %p66
      %s69 = sadd.s32 %s68, 1
      %p72 = scmp.eq.s32.totalorder %s20, 7
      %p73 = scmp.ne.s32.totalorder %s68, %s70
      %p74 = scmp.eq.s32.totalorder %s20, 0
      %p75 = por %p73, %p74
      %p76 = scmp.ne.s32.totalorder %s68, %s70
      %p77 = scmp.eq.s32.totalorder %s25, 7
      %p78 = por %p76, %p77
      %p79 = scmp.ne.s32.totalorder %s70, %s71
      %p80 = scmp.eq.s32.totalorder %s25, 0
      %p81 = por %p79, %p80
      %p82 = scmp.ne.s32.totalorder %s70, %s71
      %p83 = scmp.eq.s32.totalorder %s26, 7
      %p84 = por %p82, %p83
      %p86 = scmp.ne.s32.totalorder %s71, %s85
      %p87 = scmp.eq.s32.totalorder %s26, 0
      %p88 = por %p86, %p87
      %s90 = sadd.s32 %s89, 1
      %p93 = scmp.eq.s32.totalorder %s20, 7
      %p94 = scmp.ne.s32.totalorder %s89, %s91
      %p95 = scmp.eq.s32.totalorder %s20, 0
      %p96 = por %p94, %p95
      %p97 = scmp.ne.s32.totalorder %s89, %s91
      %p98 = scmp.eq.s32.totalorder %s25, 7
      %p99 = por %p97, %p98
      %p100 = scmp.ne.s32.totalorder %s91, %s92
      %p101 = scmp.eq.s32.totalorder %s25, 0
      %p102 = por %p100, %p101
      %p103 = scmp.ne.s32.totalorder %s91, %s92
      %p104 = scmp.eq.s32.totalorder %s26, 7
      %p105 = por %p103, %p104
      %p107 = scmp.ne.s32.totalorder %s92, %s106
      %p108 = scmp.eq.s32.totalorder %s26, 0
      %p109 = por %p107, %p108
      %s110 = ssub.s32 %s27, %s39
      %p111 = scmp.eq.s32.totalorder %s110, 0
      %s113 = sadd.s32 %s112, 1
      %s114 = scalar_select %p111, %s112, %s113
      %p117 = pneg %p111
      %p118 = scmp.eq.s32.totalorder %s20, 7
      %p119 = por %p117, %p118
      %p120 = scmp.ne.s32.totalorder %s112, %s115
      %p121 = scmp.eq.s32.totalorder %s20, 0
      %p122 = por %p120, %p121
      %p123 = scmp.ne.s32.totalorder %s112, %s115
      %p124 = scmp.eq.s32.totalorder %s25, 7
      %p125 = por %p123, %p124
      %p126 = scmp.ne.s32.totalorder %s115, %s116
      %p127 = scmp.eq.s32.totalorder %s25, 0
      %p128 = por %p126, %p127
      %p129 = scmp.ne.s32.totalorder %s115, %s116
      %p130 = scmp.eq.s32.totalorder %s26, 7
      %p131 = por %p129, %p130
      %p133 = scmp.ne.s32.totalorder %s116, %s132
      %p134 = scmp.eq.s32.totalorder %s26, 0
      %p135 = por %p133, %p134
      %s136 = ssub.s32 %s27, %s39
      %p137 = scmp.eq.s32.totalorder %s136, 0
      %s139 = sadd.s32 %s138, 1
      %s140 = scalar_select %p137, %s138, %s139
      %p143 = pneg %p137
      %p144 = scmp.eq.s32.totalorder %s20, 7
      %p145 = por %p143, %p144
      %p146 = scmp.ne.s32.totalorder %s138, %s141
      %p147 = scmp.eq.s32.totalorder %s20, 0
      %p148 = por %p146, %p147
      %p149 = scmp.ne.s32.totalorder %s138, %s141
      %p150 = scmp.eq.s32.totalorder %s25, 7
      %p151 = por %p149, %p150
      %p152 = scmp.ne.s32.totalorder %s141, %s142
      %p153 = scmp.eq.s32.totalorder %s25, 0
      %p154 = por %p152, %p153
      %p155 = scmp.ne.s32.totalorder %s141, %s142
      %p156 = scmp.eq.s32.totalorder %s26, 7
      %p157 = por %p155, %p156
      %p159 = scmp.ne.s32.totalorder %s142, %s158
      %p160 = scmp.eq.s32.totalorder %s26, 0
      %p161 = por %p159, %p160
      %p162 = scmp.le.s32.totalorder 1, %s20
      %p163 = scmp.lt.s32.totalorder %s20, 9
      %p164 = pnand %p162, %p163
      %p165 = pneg %p164
      // Predicated region
      $region9: #{tpu_custom_call.1} parent=5 // pred_check
        _
      $region10: #{tpu_custom_call.1} parent=5 // pred_check_branch
        %167 = sbr.rel (%p164) target = $region12
      $region11: #{tpu_custom_call.1} parent=5 // pred_region
        %s168 = ssub.s32 %s20, 1
        // Predicated region
        $region13: #{tpu_custom_call.1} parent=11 // pred_check
          %p169 = pneg %p81
        $region14: #{tpu_custom_call.1} parent=11 // pred_check_branch
          %171 = sbr.rel (%p169) target = $region16
        $region15: #{tpu_custom_call.1} parent=11 // pred_region
          _
        $region16: #{tpu_custom_call.1} parent=11 // pred_fallthru
          _
        // Predicated region
        $region17: #{tpu_custom_call.1} parent=11 // pred_check
          %p172 = pneg %p102
        $region18: #{tpu_custom_call.1} parent=11 // pred_check_branch
          %174 = sbr.rel (%p172) target = $region20
        $region19: #{tpu_custom_call.1} parent=11 // pred_region
          _
        $region20: #{tpu_custom_call.1} parent=11 // pred_fallthru
          _
      $region12: #{tpu_custom_call.1} parent=5 // pred_fallthru
        _
      %p175 = scmp.lt.s32.totalorder %s20, 8
      // Predicated region
      $region21: #{tpu_custom_call.1} parent=5 // pred_check
        %p176 = pneg %p175
      $region22: #{tpu_custom_call.1} parent=5 // pred_check_branch
        %178 = sbr.rel (%p176) target = $region24
      $region23: #{tpu_custom_call.1} parent=5 // pred_region
        // Predicated region
        $region25: #{tpu_custom_call.1} parent=23 // pred_check
          %p179 = pneg %p54
        $region26: #{tpu_custom_call.1} parent=23 // pred_check_branch
          %181 = sbr.rel (%p179) target = $region28
        $region27: #{tpu_custom_call.1} parent=23 // pred_region
          %s182 = sand.u32 %s44, 1
          %s183 = scalar_lea.sflag [#allocation5], %s182
          %s184 = sand.u32 %s44, 1
          %s185 = smul.addr %s184, 192
          %s186 = scalar_lea.vmem [#allocation4], %s185
          %s188 = ssub.s32 3072, 3072
          %189 = vsyncadd %s183, %s188
          %s190 = smul.addr %s28, 48
          %s191 = smul.addr %s27, 192
          %s192 = sadd.s32 %s190, %s191
          %s193 = smul.addr %s192, 64
          %s194 = scalar_lea.hbm %s0, %s193
          %s195 = sshll.u32 %s186, 4
          %s196 = int_to_ptr.vmem [resolvable:$true] %s195
          %201 = dma.hbm_to_vmem [thread:$0]  %s194, 3072, %s196, %s183, 192, 192, 12
        $region28: #{tpu_custom_call.1} parent=23 // pred_fallthru
          _
      $region24: #{tpu_custom_call.1} parent=5 // pred_fallthru
        _
      %p202 = scmp.le.s32.totalorder 1, %s20
      %p203 = scmp.lt.s32.totalorder %s20, 9
      %p204 = pnand %p202, %p203
      %p205 = pneg %p204
      // Predicated region
      $region29: #{tpu_custom_call.1} parent=5 // pred_check
        _
      $region30: #{tpu_custom_call.1} parent=5 // pred_check_branch
        %207 = sbr.rel (%p204) target = $region32
      $region31: #{tpu_custom_call.1} parent=5 // pred_region
        %s208 = ssub.s32 %s20, 1
        %s209 = sand.u32 %s47, 1
        %s210 = scalar_lea.sflag [#allocation5], %s209
        %s211 = sand.u32 %s47, 1
        %s212 = smul.addr %s211, 192
        %s213 = scalar_lea.vmem [#allocation4], %s212
        // Predicated region
        $region33: #{tpu_custom_call.1} parent=31 // pred_check
          %p214 = pneg %p60
        $region34: #{tpu_custom_call.1} parent=31 // pred_check_branch
          %216 = sbr.rel (%p214) target = $region36
        $region35: #{tpu_custom_call.1} parent=31 // pred_region
          %217 = dma.done %s210, 3072
        $region36: #{tpu_custom_call.1} parent=31 // pred_fallthru
          _
        %s218 = sand.u32 %s47, 1
        %s219 = scalar_lea.sflag [#allocation5], %s218
        %s220 = sand.u32 %s47, 1
        %s221 = smul.addr %s220, 192
        %s222 = scalar_lea.vmem [#allocation4], %s221
        %p223 = pneg %p60
        %p224 = pneg %p57
        %p225 = pneg %p81
        %p226 = pneg %p78
        %p227 = pneg %p102
        %p228 = pneg %p99
        %p229 = pneg %p128
        %p230 = pneg %p125
        %s231 = sand.u32 %s115, 1
        %s232 = scalar_lea.sflag [#allocation6], %s231
        %s233 = sand.u32 %s115, 1
        %s234 = smul.addr %s233, 96
        %s235 = scalar_lea.vmem [#allocation7], %s234
        %p236 = pneg %p154
        %p237 = pneg %p151
        %s238 = sand.u32 %s141, 1
        %s239 = scalar_lea.sflag [#allocation9], %s238
        %s240 = sand.u32 %s141, 1
        %s241 = smul.addr %s240, 96
        %s242 = scalar_lea.vmem [#allocation8], %s241
        %p244 = scmp.eq.s32.totalorder %s30, 0
        // Predicated region
        $region37: #{tpu_custom_call.1} parent=31 // pred_check
          %p245 = pneg %p244
        $region38: #{tpu_custom_call.1} parent=31 // pred_check_branch
          %247 = sbr.rel (%p245) target = $region40
        $region39: #{tpu_custom_call.1} parent=31 // pred_region
          %248 = vst [vmem:[#allocation2] sm:$0xff] 0
          %249 = vst [vmem:[#allocation2 + $0x8] sm:$0xf] 0
          %250 = vst [vmem:[#allocation2 + $0xc] sm:$0xff] 0
          %251 = vst [vmem:[#allocation2 + $0x14] sm:$0xf] 0
          %252 = vst [vmem:[#allocation2 + $0x18] sm:$0xff] 0
          %253 = vst [vmem:[#allocation2 + $0x20] sm:$0xf] 0
          %254 = vst [vmem:[#allocation2 + $0x24] sm:$0xff] 0
          %255 = vst [vmem:[#allocation2 + $0x2c] sm:$0xf] 0
          %256 = vst [vmem:[#allocation2 + $0x30] sm:$0xff] 0
          %257 = vst [vmem:[#allocation2 + $0x38] sm:$0xf] 0
          %258 = vst [vmem:[#allocation2 + $0x3c] sm:$0xff] 0
          %259 = vst [vmem:[#allocation2 + $0x44] sm:$0xf] 0
          %260 = vst [vmem:[#allocation2 + $0x48] sm:$0xff] 0
          %261 = vst [vmem:[#allocation2 + $0x50] sm:$0xf] 0
          %262 = vst [vmem:[#allocation2 + $0x54] sm:$0xff] 0
          %263 = vst [vmem:[#allocation2 + $0x5c] sm:$0xf] 0
          %264 = vst [vmem:[#allocation2 + $0x60] sm:$0xff] 0
          %265 = vst [vmem:[#allocation2 + $0x68] sm:$0xf] 0
          %266 = vst [vmem:[#allocation2 + $0x6c] sm:$0xff] 0
          %267 = vst [vmem:[#allocation2 + $0x74] sm:$0xf] 0
          %268 = vst [vmem:[#allocation2 + $0x78] sm:$0xff] 0
          %269 = vst [vmem:[#allocation2 + $0x80] sm:$0xf] 0
          %270 = vst [vmem:[#allocation2 + $0x84] sm:$0xff] 0
          %271 = vst [vmem:[#allocation2 + $0x8c] sm:$0xf] 0
          %272 = vst [vmem:[#allocation2 + $0x90] sm:$0xff] 0
          %273 = vst [vmem:[#allocation2 + $0x98] sm:$0xf] 0
          %274 = vst [vmem:[#allocation2 + $0x9c] sm:$0xff] 0
          %275 = vst [vmem:[#allocation2 + $0xa4] sm:$0xf] 0
          %276 = vst [vmem:[#allocation2 + $0xa8] sm:$0xff] 0
          %277 = vst [vmem:[#allocation2 + $0xb0] sm:$0xf] 0
          %278 = vst [vmem:[#allocation2 + $0xb4] sm:$0xff] 0
          %279 = vst [vmem:[#allocation2 + $0xbc] sm:$0xf] 0
          %280 = vst [vmem:[#allocation2 + $0xc0] sm:$0xff] 0
          %281 = vst [vmem:[#allocation2 + $0xc8] sm:$0xf] 0
          %282 = vst [vmem:[#allocation2 + $0xcc] sm:$0xff] 0
          %283 = vst [vmem:[#allocation2 + $0xd4] sm:$0xf] 0
          %284 = vst [vmem:[#allocation2 + $0xd8] sm:$0xff] 0
          %285 = vst [vmem:[#allocation2 + $0xe0] sm:$0xf] 0
          %286 = vst [vmem:[#allocation2 + $0xe4] sm:$0xff] 0
          %287 = vst [vmem:[#allocation2 + $0xec] sm:$0xf] 0
          %288 = vst [vmem:[#allocation2 + $0xf0] sm:$0xff] 0
          %289 = vst [vmem:[#allocation2 + $0xf8] sm:$0xf] 0
          %290 = vst [vmem:[#allocation2 + $0xfc] sm:$0xff] 0
          %291 = vst [vmem:[#allocation2 + $0x104] sm:$0xf] 0
          %292 = vst [vmem:[#allocation2 + $0x108] sm:$0xff] 0
          %293 = vst [vmem:[#allocation2 + $0x110] sm:$0xf] 0
          %294 = vst [vmem:[#allocation2 + $0x114] sm:$0xff] 0
          %295 = vst [vmem:[#allocation2 + $0x11c] sm:$0xf] 0
          %296 = vst [vmem:[#allocation2 + $0x120] sm:$0xff] 0
          %297 = vst [vmem:[#allocation2 + $0x128] sm:$0xf] 0
          %298 = vst [vmem:[#allocation2 + $0x12c] sm:$0xff] 0
          %299 = vst [vmem:[#allocation2 + $0x134] sm:$0xf] 0
          %300 = vst [vmem:[#allocation2 + $0x138] sm:$0xff] 0
          %301 = vst [vmem:[#allocation2 + $0x140] sm:$0xf] 0
          %302 = vst [vmem:[#allocation2 + $0x144] sm:$0xff] 0
          %303 = vst [vmem:[#allocation2 + $0x14c] sm:$0xf] 0
          %304 = vst [vmem:[#allocation2 + $0x150] sm:$0xff] 0
          %305 = vst [vmem:[#allocation2 + $0x158] sm:$0xf] 0
          %306 = vst [vmem:[#allocation2 + $0x15c] sm:$0xff] 0
          %307 = vst [vmem:[#allocation2 + $0x164] sm:$0xf] 0
          %308 = vst [vmem:[#allocation2 + $0x168] sm:$0xff] 0
          %309 = vst [vmem:[#allocation2 + $0x170] sm:$0xf] 0
          %310 = vst [vmem:[#allocation2 + $0x174] sm:$0xff] 0
          %311 = vst [vmem:[#allocation2 + $0x17c] sm:$0xf] 0
          %312 = vst [vmem:[#allocation2 + $0x180] sm:$0xff] 0
          %313 = vst [vmem:[#allocation2 + $0x188] sm:$0xf] 0
          %314 = vst [vmem:[#allocation2 + $0x18c] sm:$0xff] 0
          %315 = vst [vmem:[#allocation2 + $0x194] sm:$0xf] 0
          %316 = vst [vmem:[#allocation2 + $0x198] sm:$0xff] 0
          %317 = vst [vmem:[#allocation2 + $0x1a0] sm:$0xf] 0
          %318 = vst [vmem:[#allocation2 + $0x1a4] sm:$0xff] 0
          %319 = vst [vmem:[#allocation2 + $0x1ac] sm:$0xf] 0
          %320 = vst [vmem:[#allocation3] sm:$0xff] 0.0
          %321 = vst [vmem:[#allocation3 + $0x8] sm:$0xff] 0.0
          %322 = vst [vmem:[#allocation3 + $0x10] sm:$0xff] 0.0
          %323 = vst [vmem:[#allocation3 + $0x18] sm:$0xff] 0.0
          %324 = vst [vmem:[#allocation3 + $0x20] sm:$0xff] 0.0
          %325 = vst [vmem:[#allocation3 + $0x28] sm:$0xff] 0.0
          %326 = vst [vmem:[#allocation3 + $0x30] sm:$0xff] 0.0
          %327 = vst [vmem:[#allocation3 + $0x38] sm:$0xff] 0.0
          %328 = vst [vmem:[#allocation3 + $0x40] sm:$0xff] 0.0
          %329 = vst [vmem:[#allocation3 + $0x48] sm:$0xff] 0.0
          %330 = vst [vmem:[#allocation3 + $0x50] sm:$0xff] 0.0
          %331 = vst [vmem:[#allocation3 + $0x58] sm:$0xff] 0.0
        $region40: #{tpu_custom_call.1} parent=31 // pred_fallthru
          _
        %s332 = smul.u32 %s30, 48
        %s333 = smul.addr %s332, 4
        %s334 = scalar_lea.vmem %s1, %s333
        %v335 = vld [vmem:[%s334] sm:$0xff]
        %v336 = vld [vmem:[%s334 + $0x8] sm:$0xf]
        %v337 = vld [vmem:[%s334 + $0xc] sm:$0xff]
        %v338 = vld [vmem:[%s334 + $0x14] sm:$0xf]
        %v339 = vld [vmem:[%s334 + $0x18] sm:$0xff]
        %v340 = vld [vmem:[%s334 + $0x20] sm:$0xf]
        %v341 = vld [vmem:[%s334 + $0x24] sm:$0xff]
        %v342 = vld [vmem:[%s334 + $0x2c] sm:$0xf]
        %v343 = vld [vmem:[%s334 + $0x30] sm:$0xff]
        %v344 = vld [vmem:[%s334 + $0x38] sm:$0xf]
        %v345 = vld [vmem:[%s334 + $0x3c] sm:$0xff]
        %v346 = vld [vmem:[%s334 + $0x44] sm:$0xf]
        %v347 = vld [vmem:[%s334 + $0x48] sm:$0xff]
        %v348 = vld [vmem:[%s334 + $0x50] sm:$0xf]
        %v349 = vld [vmem:[%s334 + $0x54] sm:$0xff]
        %v350 = vld [vmem:[%s334 + $0x5c] sm:$0xf]
        %v351 = vld [vmem:[%s334 + $0x60] sm:$0xff]
        %v352 = vld [vmem:[%s334 + $0x68] sm:$0xf]
        %v353 = vld [vmem:[%s334 + $0x6c] sm:$0xff]
        %v354 = vld [vmem:[%s334 + $0x74] sm:$0xf]
        %v355 = vld [vmem:[%s334 + $0x78] sm:$0xff]
        %v356 = vld [vmem:[%s334 + $0x80] sm:$0xf]
        %v357 = vld [vmem:[%s334 + $0x84] sm:$0xff]
        %v358 = vld [vmem:[%s334 + $0x8c] sm:$0xf]
        %v359 = vld [vmem:[%s334 + $0x90] sm:$0xff]
        %v360 = vld [vmem:[%s334 + $0x98] sm:$0xf]
        %v361 = vld [vmem:[%s334 + $0x9c] sm:$0xff]
        %v362 = vld [vmem:[%s334 + $0xa4] sm:$0xf]
        %v363 = vld [vmem:[%s334 + $0xa8] sm:$0xff]
        %v364 = vld [vmem:[%s334 + $0xb0] sm:$0xf]
        %v365 = vld [vmem:[%s334 + $0xb4] sm:$0xff]
        %v366 = vld [vmem:[%s334 + $0xbc] sm:$0xf]
        %v367 = vld [vmem:[#allocation2] sm:$0xff]
        %v368 = vld [vmem:[#allocation2 + $0x8] sm:$0xf]
        %v369 = vld [vmem:[#allocation2 + $0xc] sm:$0xff]
        %v370 = vld [vmem:[#allocation2 + $0x14] sm:$0xf]
        %v371 = vld [vmem:[#allocation2 + $0x18] sm:$0xff]
        %v372 = vld [vmem:[#allocation2 + $0x20] sm:$0xf]
        %v373 = vld [vmem:[#allocation2 + $0x24] sm:$0xff]
        %v374 = vld [vmem:[#allocation2 + $0x2c] sm:$0xf]
        %v375 = vld [vmem:[#allocation2 + $0x30] sm:$0xff]
        %v376 = vld [vmem:[#allocation2 + $0x38] sm:$0xf]
        %v377 = vld [vmem:[#allocation2 + $0x3c] sm:$0xff]
        %v378 = vld [vmem:[#allocation2 + $0x44] sm:$0xf]
        %v379 = vld [vmem:[#allocation2 + $0x48] sm:$0xff]
        %v380 = vld [vmem:[#allocation2 + $0x50] sm:$0xf]
        %v381 = vld [vmem:[#allocation2 + $0x54] sm:$0xff]
        %v382 = vld [vmem:[#allocation2 + $0x5c] sm:$0xf]
        %v383 = vld [vmem:[#allocation2 + $0x60] sm:$0xff]
        %v384 = vld [vmem:[#allocation2 + $0x68] sm:$0xf]
        %v385 = vld [vmem:[#allocation2 + $0x6c] sm:$0xff]
        %v386 = vld [vmem:[#allocation2 + $0x74] sm:$0xf]
        %v387 = vld [vmem:[#allocation2 + $0x78] sm:$0xff]
        %v388 = vld [vmem:[#allocation2 + $0x80] sm:$0xf]
        %v389 = vld [vmem:[#allocation2 + $0x84] sm:$0xff]
        %v390 = vld [vmem:[#allocation2 + $0x8c] sm:$0xf]
        %v391 = vld [vmem:[#allocation2 + $0x90] sm:$0xff]
        %v392 = vld [vmem:[#allocation2 + $0x98] sm:$0xf]
        %v393 = vld [vmem:[#allocation2 + $0x9c] sm:$0xff]
        %v394 = vld [vmem:[#allocation2 + $0xa4] sm:$0xf]
        %v395 = vld [vmem:[#allocation2 + $0xa8] sm:$0xff]
        %v396 = vld [vmem:[#allocation2 + $0xb0] sm:$0xf]
        %v397 = vld [vmem:[#allocation2 + $0xb4] sm:$0xff]
        %v398 = vld [vmem:[#allocation2 + $0xbc] sm:$0xf]
        %v399 = vld [vmem:[#allocation2 + $0xc0] sm:$0xff]
        %v400 = vld [vmem:[#allocation2 + $0xc8] sm:$0xf]
        %v401 = vld [vmem:[#allocation2 + $0xcc] sm:$0xff]
        %v402 = vld [vmem:[#allocation2 + $0xd4] sm:$0xf]
        %v403 = vld [vmem:[#allocation2 + $0xd8] sm:$0xff]
        %v404 = vld [vmem:[#allocation2 + $0xe0] sm:$0xf]
        %v405 = vld [vmem:[#allocation2 + $0xe4] sm:$0xff]
        %v406 = vld [vmem:[#allocation2 + $0xec] sm:$0xf]
        %v407 = vld [vmem:[#allocation2 + $0xf0] sm:$0xff]
        %v408 = vld [vmem:[#allocation2 + $0xf8] sm:$0xf]
        %v409 = vld [vmem:[#allocation2 + $0xfc] sm:$0xff]
        %v410 = vld [vmem:[#allocation2 + $0x104] sm:$0xf]
        %v411 = vld [vmem:[#allocation2 + $0x108] sm:$0xff]
        %v412 = vld [vmem:[#allocation2 + $0x110] sm:$0xf]
        %v413 = vld [vmem:[#allocation2 + $0x114] sm:$0xff]
        %v414 = vld [vmem:[#allocation2 + $0x11c] sm:$0xf]
        %v415 = vld [vmem:[#allocation2 + $0x120] sm:$0xff]
        %v416 = vld [vmem:[#allocation2 + $0x128] sm:$0xf]
        %v417 = vld [vmem:[#allocation2 + $0x12c] sm:$0xff]
        %v418 = vld [vmem:[#allocation2 + $0x134] sm:$0xf]
        %v419 = vld [vmem:[#allocation2 + $0x138] sm:$0xff]
        %v420 = vld [vmem:[#allocation2 + $0x140] sm:$0xf]
        %v421 = vld [vmem:[#allocation2 + $0x144] sm:$0xff]
        %v422 = vld [vmem:[#allocation2 + $0x14c] sm:$0xf]
        %v423 = vld [vmem:[#allocation2 + $0x150] sm:$0xff]
        %v424 = vld [vmem:[#allocation2 + $0x158] sm:$0xf]
        %v425 = vld [vmem:[#allocation2 + $0x15c] sm:$0xff]
        %v426 = vld [vmem:[#allocation2 + $0x164] sm:$0xf]
        %v427 = vld [vmem:[#allocation2 + $0x168] sm:$0xff]
        %v428 = vld [vmem:[#allocation2 + $0x170] sm:$0xf]
        %v429 = vld [vmem:[#allocation2 + $0x174] sm:$0xff]
        %v430 = vld [vmem:[#allocation2 + $0x17c] sm:$0xf]
        %v431 = vld [vmem:[#allocation2 + $0x180] sm:$0xff]
        %v432 = vld [vmem:[#allocation2 + $0x188] sm:$0xf]
        %v433 = vld [vmem:[#allocation2 + $0x18c] sm:$0xff]
        %v434 = vld [vmem:[#allocation2 + $0x194] sm:$0xf]
        %v435 = vld [vmem:[#allocation2 + $0x198] sm:$0xff]
        %v436 = vld [vmem:[#allocation2 + $0x1a0] sm:$0xf]
        %v437 = vld [vmem:[#allocation2 + $0x1a4] sm:$0xff]
        %v438 = vld [vmem:[#allocation2 + $0x1ac] sm:$0xf]
        %v471 = vunpack.c.l.b16 %v335
        %v472 = vunpack.c.h.b16 %v335
        %v473 = vunpack.c.l.b16 %v336
        %v474 = vunpack.c.l.b16 %v337
        %v475 = vunpack.c.h.b16 %v337
        %v476 = vunpack.c.l.b16 %v338
        %v477 = vunpack.c.l.b16 %v339
        %v478 = vunpack.c.h.b16 %v339
        %v479 = vunpack.c.l.b16 %v340
        %v480 = vunpack.c.l.b16 %v341
        %v481 = vunpack.c.h.b16 %v341
        %v482 = vunpack.c.l.b16 %v342
        %v483 = vunpack.c.l.b16 %v343
        %v484 = vunpack.c.h.b16 %v343
        %v485 = vunpack.c.l.b16 %v344
        %v486 = vunpack.c.l.b16 %v345
        %v487 = vunpack.c.h.b16 %v345
        %v488 = vunpack.c.l.b16 %v346
        %v489 = vunpack.c.l.b16 %v347
        %v490 = vunpack.c.h.b16 %v347
        %v491 = vunpack.c.l.b16 %v348
        %v492 = vunpack.c.l.b16 %v349
        %v493 = vunpack.c.h.b16 %v349
        %v494 = vunpack.c.l.b16 %v350
        %v495 = vunpack.c.l.b16 %v351
        %v496 = vunpack.c.h.b16 %v351
        %v497 = vunpack.c.l.b16 %v352
        %v498 = vunpack.c.l.b16 %v353
        %v499 = vunpack.c.h.b16 %v353
        %v500 = vunpack.c.l.b16 %v354
        %v501 = vunpack.c.l.b16 %v355
        %v502 = vunpack.c.h.b16 %v355
        %v503 = vunpack.c.l.b16 %v356
        %v504 = vunpack.c.l.b16 %v357
        %v505 = vunpack.c.h.b16 %v357
        %v506 = vunpack.c.l.b16 %v358
        %v507 = vunpack.c.l.b16 %v359
        %v508 = vunpack.c.h.b16 %v359
        %v509 = vunpack.c.l.b16 %v360
        %v510 = vunpack.c.l.b16 %v361
        %v511 = vunpack.c.h.b16 %v361
        %v512 = vunpack.c.l.b16 %v362
        %v513 = vunpack.c.l.b16 %v363
        %v514 = vunpack.c.h.b16 %v363
        %v515 = vunpack.c.l.b16 %v364
        %v516 = vunpack.c.l.b16 %v365
        %v517 = vunpack.c.h.b16 %v365
        %v518 = vunpack.c.l.b16 %v366
        %v519 = vpack.c.b16 %v474, %v471
        %v520 = vpack.c.b16 %v475, %v472
        %v521 = vpack.c.b16 %v476, %v473
        %v522 = vpack.c.b16 %v480, %v477
        %v523 = vpack.c.b16 %v481, %v478
        %v524 = vpack.c.b16 %v482, %v479
        %v525 = vpack.c.b16 %v486, %v483
        %v526 = vpack.c.b16 %v487, %v484
        %v527 = vpack.c.b16 %v488, %v485
        %v528 = vpack.c.b16 %v492, %v489
        %v529 = vpack.c.b16 %v493, %v490
        %v530 = vpack.c.b16 %v494, %v491
        %v531 = vpack.c.b16 %v498, %v495
        %v532 = vpack.c.b16 %v499, %v496
        %v533 = vpack.c.b16 %v500, %v497
        %v534 = vpack.c.b16 %v504, %v501
        %v535 = vpack.c.b16 %v505, %v502
        %v536 = vpack.c.b16 %v506, %v503
        %v537 = vpack.c.b16 %v510, %v507
        %v538 = vpack.c.b16 %v511, %v508
        %v539 = vpack.c.b16 %v512, %v509
        %v540 = vpack.c.b16 %v516, %v513
        %v541 = vpack.c.b16 %v517, %v514
        %v542 = vpack.c.b16 %v518, %v515
        %v631 = vunpack.c.l.b16 %v367
        %v632 = vunpack.c.h.b16 %v367
        %v633 = vunpack.c.l.b16 %v368
        %v634 = vunpack.c.l.b16 %v369
        %v635 = vunpack.c.h.b16 %v369
        %v636 = vunpack.c.l.b16 %v370
        %v637 = vunpack.c.l.b16 %v371
        %v638 = vunpack.c.h.b16 %v371
        %v639 = vunpack.c.l.b16 %v372
        %v640 = vunpack.c.l.b16 %v373
        %v641 = vunpack.c.h.b16 %v373
        %v642 = vunpack.c.l.b16 %v374
        %v643 = vunpack.c.l.b16 %v375
        %v644 = vunpack.c.h.b16 %v375
        %v645 = vunpack.c.l.b16 %v376
        %v646 = vunpack.c.l.b16 %v377
        %v647 = vunpack.c.h.b16 %v377
        %v648 = vunpack.c.l.b16 %v378
        %v649 = vunpack.c.l.b16 %v379
        %v650 = vunpack.c.h.b16 %v379
        %v651 = vunpack.c.l.b16 %v380
        %v652 = vunpack.c.l.b16 %v381
        %v653 = vunpack.c.h.b16 %v381
        %v654 = vunpack.c.l.b16 %v382
        %v655 = vunpack.c.l.b16 %v383
        %v656 = vunpack.c.h.b16 %v383
        %v657 = vunpack.c.l.b16 %v384
        %v658 = vunpack.c.l.b16 %v385
        %v659 = vunpack.c.h.b16 %v385
        %v660 = vunpack.c.l.b16 %v386
        %v661 = vunpack.c.l.b16 %v387
        %v662 = vunpack.c.h.b16 %v387
        %v663 = vunpack.c.l.b16 %v388
        %v664 = vunpack.c.l.b16 %v389
        %v665 = vunpack.c.h.b16 %v389
        %v666 = vunpack.c.l.b16 %v390
        %v667 = vunpack.c.l.b16 %v391
        %v668 = vunpack.c.h.b16 %v391
        %v669 = vunpack.c.l.b16 %v392
        %v670 = vunpack.c.l.b16 %v393
        %v671 = vunpack.c.h.b16 %v393
        %v672 = vunpack.c.l.b16 %v394
        %v673 = vunpack.c.l.b16 %v395
        %v674 = vunpack.c.h.b16 %v395
        %v675 = vunpack.c.l.b16 %v396
        %v676 = vunpack.c.l.b16 %v397
        %v677 = vunpack.c.h.b16 %v397
        %v678 = vunpack.c.l.b16 %v398
        %v679 = vunpack.c.l.b16 %v399
        %v680 = vunpack.c.h.b16 %v399
        %v681 = vunpack.c.l.b16 %v400
        %v682 = vunpack.c.l.b16 %v401
        %v683 = vunpack.c.h.b16 %v401
        %v684 = vunpack.c.l.b16 %v402
        %v685 = vunpack.c.l.b16 %v403
        %v686 = vunpack.c.h.b16 %v403
        %v687 = vunpack.c.l.b16 %v404
        %v688 = vunpack.c.l.b16 %v405
        %v689 = vunpack.c.h.b16 %v405
        %v690 = vunpack.c.l.b16 %v406
        %v691 = vunpack.c.l.b16 %v407
        %v692 = vunpack.c.h.b16 %v407
        %v693 = vunpack.c.l.b16 %v408
        %v694 = vunpack.c.l.b16 %v409
        %v695 = vunpack.c.h.b16 %v409
        %v696 = vunpack.c.l.b16 %v410
        %v697 = vunpack.c.l.b16 %v411
        %v698 = vunpack.c.h.b16 %v411
        %v699 = vunpack.c.l.b16 %v412
        %v700 = vunpack.c.l.b16 %v413
        %v701 = vunpack.c.h.b16 %v413
        %v702 = vunpack.c.l.b16 %v414
        %v703 = vunpack.c.l.b16 %v415
        %v704 = vunpack.c.h.b16 %v415
        %v705 = vunpack.c.l.b16 %v416
        %v706 = vunpack.c.l.b16 %v417
        %v707 = vunpack.c.h.b16 %v417
        %v708 = vunpack.c.l.b16 %v418
        %v709 = vunpack.c.l.b16 %v419
        %v710 = vunpack.c.h.b16 %v419
        %v711 = vunpack.c.l.b16 %v420
        %v712 = vunpack.c.l.b16 %v421
        %v713 = vunpack.c.h.b16 %v421
        %v714 = vunpack.c.l.b16 %v422
        %v715 = vunpack.c.l.b16 %v423
        %v716 = vunpack.c.h.b16 %v423
        %v717 = vunpack.c.l.b16 %v424
        %v718 = vunpack.c.l.b16 %v425
        %v719 = vunpack.c.h.b16 %v425
        %v720 = vunpack.c.l.b16 %v426
        %v721 = vunpack.c.l.b16 %v427
        %v722 = vunpack.c.h.b16 %v427
        %v723 = vunpack.c.l.b16 %v428
        %v724 = vunpack.c.l.b16 %v429
        %v725 = vunpack.c.h.b16 %v429
        %v726 = vunpack.c.l.b16 %v430
        %v727 = vunpack.c.l.b16 %v431
        %v728 = vunpack.c.h.b16 %v431
        %v729 = vunpack.c.l.b16 %v432
        %v730 = vunpack.c.l.b16 %v433
        %v731 = vunpack.c.h.b16 %v433
        %v732 = vunpack.c.l.b16 %v434
        %v733 = vunpack.c.l.b16 %v435
        %v734 = vunpack.c.h.b16 %v435
        %v735 = vunpack.c.l.b16 %v436
        %v736 = vunpack.c.l.b16 %v437
        %v737 = vunpack.c.h.b16 %v437
        %v738 = vunpack.c.l.b16 %v438
        %v739 = vpack.c.b16 %v634, %v631
        %v740 = vpack.c.b16 %v635, %v632
        %v741 = vpack.c.b16 %v636, %v633
        %v742 = vpack.c.b16 %v640, %v637
        %v743 = vpack.c.b16 %v641, %v638
        %v744 = vpack.c.b16 %v642, %v639
        %v745 = vpack.c.b16 %v646, %v643
        %v746 = vpack.c.b16 %v647, %v644
        %v747 = vpack.c.b16 %v648, %v645
        %v748 = vpack.c.b16 %v652, %v649
        %v749 = vpack.c.b16 %v653, %v650
        %v750 = vpack.c.b16 %v654, %v651
        %v751 = vpack.c.b16 %v658, %v655
        %v752 = vpack.c.b16 %v659, %v656
        %v753 = vpack.c.b16 %v660, %v657
        %v754 = vpack.c.b16 %v664, %v661
        %v755 = vpack.c.b16 %v665, %v662
        %v756 = vpack.c.b16 %v666, %v663
        %v757 = vpack.c.b16 %v670, %v667
        %v758 = vpack.c.b16 %v671, %v668
        %v759 = vpack.c.b16 %v672, %v669
        %v760 = vpack.c.b16 %v676, %v673
        %v761 = vpack.c.b16 %v677, %v674
        %v762 = vpack.c.b16 %v678, %v675
        %v763 = vpack.c.b16 %v682, %v679
        %v764 = vpack.c.b16 %v683, %v680
        %v765 = vpack.c.b16 %v684, %v681
        %v766 = vpack.c.b16 %v688, %v685
        %v767 = vpack.c.b16 %v689, %v686
        %v768 = vpack.c.b16 %v690, %v687
        %v769 = vpack.c.b16 %v694, %v691
        %v770 = vpack.c.b16 %v695, %v692
        %v771 = vpack.c.b16 %v696, %v693
        %v772 = vpack.c.b16 %v700, %v697
        %v773 = vpack.c.b16 %v701, %v698
        %v774 = vpack.c.b16 %v702, %v699
        %v775 = vpack.c.b16 %v706, %v703
        %v776 = vpack.c.b16 %v707, %v704
        %v777 = vpack.c.b16 %v708, %v705
        %v778 = vpack.c.b16 %v712, %v709
        %v779 = vpack.c.b16 %v713, %v710
        %v780 = vpack.c.b16 %v714, %v711
        %v781 = vpack.c.b16 %v718, %v715
        %v782 = vpack.c.b16 %v719, %v716
        %v783 = vpack.c.b16 %v720, %v717
        %v784 = vpack.c.b16 %v724, %v721
        %v785 = vpack.c.b16 %v725, %v722
        %v786 = vpack.c.b16 %v726, %v723
        %v787 = vpack.c.b16 %v730, %v727
        %v788 = vpack.c.b16 %v731, %v728
        %v789 = vpack.c.b16 %v732, %v729
        %v790 = vpack.c.b16 %v736, %v733
        %v791 = vpack.c.b16 %v737, %v734
        %v792 = vpack.c.b16 %v738, %v735
        %vm847 = vcmask 261120
        %v849 = vsel %vm847, %v521, 0
        %v852 = vsel %vm847, %v524, 0
        %v855 = vsel %vm847, %v527, 0
        %v858 = vsel %vm847, %v530, 0
        %v861 = vsel %vm847, %v533, 0
        %v864 = vsel %vm847, %v536, 0
        %v867 = vsel %vm847, %v539, 0
        %v870 = vsel %vm847, %v542, 0
        %872 = vmatprep.subr.bf16.mxu0 %v761
        %873 = vmatpush1.bf16.msra.mxu0 %v760
        %874 = vmatprep.subr.bf16.mxu0 %v758
        %875 = vmatpush1.bf16.msra.mxu0 %v757
        %876 = vmatprep.subr.bf16.mxu0 %v755
        %877 = vmatpush1.bf16.msra.mxu0 %v754
        %878 = vmatprep.subr.bf16.mxu0 %v752
        %879 = vmatpush1.bf16.msra.mxu0 %v751
        %880 = vmatprep.subr.bf16.mxu0 %v749
        %881 = vmatpush1.bf16.msra.mxu0 %v748
        %882 = vmatprep.subr.bf16.mxu0 %v746
        %883 = vmatpush1.bf16.msra.mxu0 %v745
        %884 = vmatprep.subr.bf16.mxu0 %v743
        %885 = vmatpush1.bf16.msra.mxu0 %v742
        %886 = vmatprep.subr.bf16.mxu0 %v740
        %887 = vmatpush1.bf16.msra.mxu0 %v739
        %888 = vmatprep.subr.bf16.mxu0 %v785
        %889 = vmatpush2.bf16.msra.mxu0 %v784
        %890 = vmatprep.subr.bf16.mxu0 %v782
        %891 = vmatpush2.bf16.msra.mxu0 %v781
        %892 = vmatprep.subr.bf16.mxu0 %v779
        %893 = vmatpush2.bf16.msra.mxu0 %v778
        %894 = vmatprep.subr.bf16.mxu0 %v776
        %895 = vmatpush2.bf16.msra.mxu0 %v775
        %896 = vmatprep.subr.bf16.mxu0 %v773
        %897 = vmatpush2.bf16.msra.mxu0 %v772
        %898 = vmatprep.subr.bf16.mxu0 %v770
        %899 = vmatpush2.bf16.msra.mxu0 %v769
        %900 = vmatprep.subr.bf16.mxu0 %v767
        %901 = vmatpush2.bf16.msra.mxu0 %v766
        %902 = vmatprep.subr.bf16.mxu0 %v764
        %903 = vmatpush2.bf16.msra.mxu0 %v763
        %904 = vmatprep.mubr.bf16.mxu0 %v520
        %905 = vmatmul.mubr.bf16.gmra.mxu0 %v519
        %v906 = vpop.f32.mrf.mxu0
        %v907 = vadd.f32 0.0, %v906
        %v908 = vpop.f32.mrf.mxu0
        %v909 = vadd.f32 0.0, %v908
        %v910 = vpop.f32.mrf.mxu0
        %v911 = vadd.f32 0.0, %v910
        %v912 = vpop.f32.mrf.mxu0
        %v913 = vadd.f32 0.0, %v912
        %914 = vmatprep.mubr.bf16.mxu0 %v523
        %915 = vmatmul.mubr.bf16.gmra.mxu0 %v522
        %v916 = vpop.f32.mrf.mxu0
        %v917 = vadd.f32 0.0, %v916
        %v918 = vpop.f32.mrf.mxu0
        %v919 = vadd.f32 0.0, %v918
        %v920 = vpop.f32.mrf.mxu0
        %v921 = vadd.f32 0.0, %v920
        %v922 = vpop.f32.mrf.mxu0
        %v923 = vadd.f32 0.0, %v922
        %924 = vmatprep.mubr.bf16.mxu0 %v526
        %925 = vmatmul.mubr.bf16.gmra.mxu0 %v525
        %v926 = vpop.f32.mrf.mxu0
        %v927 = vadd.f32 0.0, %v926
        %v928 = vpop.f32.mrf.mxu0
        %v929 = vadd.f32 0.0, %v928
        %v930 = vpop.f32.mrf.mxu0
        %v931 = vadd.f32 0.0, %v930
        %v932 = vpop.f32.mrf.mxu0
        %v933 = vadd.f32 0.0, %v932
        %934 = vmatprep.mubr.bf16.mxu0 %v529
        %935 = vmatmul.mubr.bf16.gmra.mxu0 %v528
        %v936 = vpop.f32.mrf.mxu0
        %v937 = vadd.f32 0.0, %v936
        %v938 = vpop.f32.mrf.mxu0
        %v939 = vadd.f32 0.0, %v938
        %v940 = vpop.f32.mrf.mxu0
        %v941 = vadd.f32 0.0, %v940
        %v942 = vpop.f32.mrf.mxu0
        %v943 = vadd.f32 0.0, %v942
        %944 = vmatprep.mubr.bf16.mxu0 %v532
        %945 = vmatmul.mubr.bf16.gmra.mxu0 %v531
        %v946 = vpop.f32.mrf.mxu0
        %v947 = vadd.f32 0.0, %v946
        %v948 = vpop.f32.mrf.mxu0
        %v949 = vadd.f32 0.0, %v948
        %v950 = vpop.f32.mrf.mxu0
        %v951 = vadd.f32 0.0, %v950
        %v952 = vpop.f32.mrf.mxu0
        %v953 = vadd.f32 0.0, %v952
        %954 = vmatprep.mubr.bf16.mxu0 %v535
        %955 = vmatmul.mubr.bf16.gmra.mxu0 %v534
        %v956 = vpop.f32.mrf.mxu0
        %v957 = vadd.f32 0.0, %v956
        %v958 = vpop.f32.mrf.mxu0
        %v959 = vadd.f32 0.0, %v958
        %v960 = vpop.f32.mrf.mxu0
        %v961 = vadd.f32 0.0, %v960
        %v962 = vpop.f32.mrf.mxu0
        %v963 = vadd.f32 0.0, %v962
        %964 = vmatprep.mubr.bf16.mxu0 %v538
        %965 = vmatmul.mubr.bf16.gmra.mxu0 %v537
        %v966 = vpop.f32.mrf.mxu0
        %v967 = vadd.f32 0.0, %v966
        %v968 = vpop.f32.mrf.mxu0
        %v969 = vadd.f32 0.0, %v968
        %v970 = vpop.f32.mrf.mxu0
        %v971 = vadd.f32 0.0, %v970
        %v972 = vpop.f32.mrf.mxu0
        %v973 = vadd.f32 0.0, %v972
        %974 = vmatprep.mubr.bf16.mxu0 %v541
        %975 = vmatmul.mubr.bf16.gmra.mxu0 %v540
        %v976 = vpop.f32.mrf.mxu0
        %v977 = vadd.f32 0.0, %v976
        %v978 = vpop.f32.mrf.mxu0
        %v979 = vadd.f32 0.0, %v978
        %v980 = vpop.f32.mrf.mxu0
        %v981 = vadd.f32 0.0, %v980
        %v982 = vpop.f32.mrf.mxu0
        %v983 = vadd.f32 0.0, %v982
        %984 = vdwg.mxu0
        %985 = vmatprep.subr.bf16.mxu0 0
        %986 = vmatpush1.bf16.msra.mxu0 0
        %987 = vmatprep.subr.bf16.mxu0 0
        %988 = vmatpush1.bf16.msra.mxu0 0
        %989 = vmatprep.subr.bf16.mxu0 0
        %990 = vmatpush1.bf16.msra.mxu0 0
        %991 = vmatprep.subr.bf16.mxu0 0
        %992 = vmatpush1.bf16.msra.mxu0 0
        %993 = vmatprep.subr.bf16.mxu0 0
        %994 = vmatpush1.bf16.msra.mxu0 0
        %995 = vmatprep.subr.bf16.mxu0 0
        %996 = vmatpush1.bf16.msra.mxu0 0
        %997 = vmatprep.subr.bf16.mxu0 %v791
        %998 = vmatpush1.bf16.msra.mxu0 %v790
        %999 = vmatprep.subr.bf16.mxu0 %v788
        %1000 = vmatpush1.bf16.msra.mxu0 %v787
        %1001 = vmatprep.subr.bf16.mxu0 0
        %1002 = vmatpush2.bf16.msra.mxu0 0
        %1003 = vmatprep.subr.bf16.mxu0 0
        %1004 = vmatpush2.bf16.msra.mxu0 0
        %1005 = vmatprep.subr.bf16.mxu0 0
        %1006 = vmatpush2.bf16.msra.mxu0 0
        %1007 = vmatprep.subr.bf16.mxu0 0
        %1008 = vmatpush2.bf16.msra.mxu0 0
        %1009 = vmatprep.subr.bf16.mxu0 0
        %1010 = vmatpush2.bf16.msra.mxu0 0
        %1011 = vmatprep.subr.bf16.mxu0 0
        %1012 = vmatpush2.bf16.msra.mxu0 0
        %1013 = vmatprep.subr.bf16.mxu0 0
        %1014 = vmatpush2.bf16.msra.mxu0 0
        %1015 = vmatprep.subr.bf16.mxu0 0
        %1016 = vmatpush2.bf16.msra.mxu0 0
        %1017 = vmatprep.mubr.bf16.mxu0 0
        %1018 = vmatmul.mubr.bf16.gmra.mxu0 %v849
        %v1019 = vpop.f32.mrf.mxu0
        %v1020 = vadd.f32 %v907, %v1019
        %v1021 = vpop.f32.mrf.mxu0
        %v1022 = vadd.f32 %v909, %v1021
        %v1023 = vpop.f32.mrf.mxu0
        %v1024 = vadd.f32 %v911, %v1023
        %v1025 = vpop.f32.mrf.mxu0
        %v1026 = vadd.f32 %v913, %v1025
        %1027 = vmatprep.mubr.bf16.mxu0 0
        %1028 = vmatmul.mubr.bf16.gmra.mxu0 %v852
        %v1029 = vpop.f32.mrf.mxu0
        %v1030 = vadd.f32 %v917, %v1029
        %v1031 = vpop.f32.mrf.mxu0
        %v1032 = vadd.f32 %v919, %v1031
        %v1033 = vpop.f32.mrf.mxu0
        %v1034 = vadd.f32 %v921, %v1033
        %v1035 = vpop.f32.mrf.mxu0
        %v1036 = vadd.f32 %v923, %v1035
        %1037 = vmatprep.mubr.bf16.mxu0 0
        %1038 = vmatmul.mubr.bf16.gmra.mxu0 %v855
        %v1039 = vpop.f32.mrf.mxu0
        %v1040 = vadd.f32 %v927, %v1039
        %v1041 = vpop.f32.mrf.mxu0
        %v1042 = vadd.f32 %v929, %v1041
        %v1043 = vpop.f32.mrf.mxu0
        %v1044 = vadd.f32 %v931, %v1043
        %v1045 = vpop.f32.mrf.mxu0
        %v1046 = vadd.f32 %v933, %v1045
        %1047 = vmatprep.mubr.bf16.mxu0 0
        %1048 = vmatmul.mubr.bf16.gmra.mxu0 %v858
        %v1049 = vpop.f32.mrf.mxu0
        %v1050 = vadd.f32 %v937, %v1049
        %v1051 = vpop.f32.mrf.mxu0
        %v1052 = vadd.f32 %v939, %v1051
        %v1053 = vpop.f32.mrf.mxu0
        %v1054 = vadd.f32 %v941, %v1053
        %v1055 = vpop.f32.mrf.mxu0
        %v1056 = vadd.f32 %v943, %v1055
        %1057 = vmatprep.mubr.bf16.mxu0 0
        %1058 = vmatmul.mubr.bf16.gmra.mxu0 %v861
        %v1059 = vpop.f32.mrf.mxu0
        %v1060 = vadd.f32 %v947, %v1059
        %v1061 = vpop.f32.mrf.mxu0
        %v1062 = vadd.f32 %v949, %v1061
        %v1063 = vpop.f32.mrf.mxu0
        %v1064 = vadd.f32 %v951, %v1063
        %v1065 = vpop.f32.mrf.mxu0
        %v1066 = vadd.f32 %v953, %v1065
        %1067 = vmatprep.mubr.bf16.mxu0 0
        %1068 = vmatmul.mubr.bf16.gmra.mxu0 %v864
        %v1069 = vpop.f32.mrf.mxu0
        %v1070 = vadd.f32 %v957, %v1069
        %v1071 = vpop.f32.mrf.mxu0
        %v1072 = vadd.f32 %v959, %v1071
        %v1073 = vpop.f32.mrf.mxu0
        %v1074 = vadd.f32 %v961, %v1073
        %v1075 = vpop.f32.mrf.mxu0
        %v1076 = vadd.f32 %v963, %v1075
        %1077 = vmatprep.mubr.bf16.mxu0 0
        %1078 = vmatmul.mubr.bf16.gmra.mxu0 %v867
        %v1079 = vpop.f32.mrf.mxu0
        %v1080 = vadd.f32 %v967, %v1079
        %v1081 = vpop.f32.mrf.mxu0
        %v1082 = vadd.f32 %v969, %v1081
        %v1083 = vpop.f32.mrf.mxu0
        %v1084 = vadd.f32 %v971, %v1083
        %v1085 = vpop.f32.mrf.mxu0
        %v1086 = vadd.f32 %v973, %v1085
        %1087 = vmatprep.mubr.bf16.mxu0 0
        %1088 = vmatmul.mubr.bf16.gmra.mxu0 %v870
        %v1089 = vpop.f32.mrf.mxu0
        %v1090 = vadd.f32 %v977, %v1089
        %v1091 = vpop.f32.mrf.mxu0
        %v1092 = vadd.f32 %v979, %v1091
        %v1093 = vpop.f32.mrf.mxu0
        %v1094 = vadd.f32 %v981, %v1093
        %v1095 = vpop.f32.mrf.mxu0
        %v1096 = vadd.f32 %v983, %v1095
        %1097 = vdwg.mxu0
        %1098 = vmatprep.subr.bf16.mxu0 0
        %1099 = vmatpush1.bf16.msra.mxu0 %v762
        %1100 = vmatprep.subr.bf16.mxu0 0
        %1101 = vmatpush1.bf16.msra.mxu0 %v759
        %1102 = vmatprep.subr.bf16.mxu0 0
        %1103 = vmatpush1.bf16.msra.mxu0 %v756
        %1104 = vmatprep.subr.bf16.mxu0 0
        %1105 = vmatpush1.bf16.msra.mxu0 %v753
        %1106 = vmatprep.subr.bf16.mxu0 0
        %1107 = vmatpush1.bf16.msra.mxu0 %v750
        %1108 = vmatprep.subr.bf16.mxu0 0
        %1109 = vmatpush1.bf16.msra.mxu0 %v747
        %1110 = vmatprep.subr.bf16.mxu0 0
        %1111 = vmatpush1.bf16.msra.mxu0 %v744
        %1112 = vmatprep.subr.bf16.mxu0 0
        %1113 = vmatpush1.bf16.msra.mxu0 %v741
        %1114 = vmatprep.subr.bf16.mxu0 0
        %1115 = vmatpush2.bf16.msra.mxu0 %v786
        %1116 = vmatprep.subr.bf16.mxu0 0
        %1117 = vmatpush2.bf16.msra.mxu0 %v783
        %1118 = vmatprep.subr.bf16.mxu0 0
        %1119 = vmatpush2.bf16.msra.mxu0 %v780
        %1120 = vmatprep.subr.bf16.mxu0 0
        %1121 = vmatpush2.bf16.msra.mxu0 %v777
        %1122 = vmatprep.subr.bf16.mxu0 0
        %1123 = vmatpush2.bf16.msra.mxu0 %v774
        %1124 = vmatprep.subr.bf16.mxu0 0
        %1125 = vmatpush2.bf16.msra.mxu0 %v771
        %1126 = vmatprep.subr.bf16.mxu0 0
        %1127 = vmatpush2.bf16.msra.mxu0 %v768
        %1128 = vmatprep.subr.bf16.mxu0 0
        %1129 = vmatpush2.bf16.msra.mxu0 %v765
        %1130 = vmatprep.mubr.bf16.mxu0 %v520
        %1131 = vmatmul.mubr.bf16.gmra.mxu0 %v519
        %v1132 = vpop.f32.mrf.mxu0
        %v1133 = vadd.f32 0.0, %v1132
        %v1134 = vpop.f32.mrf.mxu0
        %v1135 = vpop.f32.mrf.mxu0
        %v1136 = vadd.f32 0.0, %v1135
        %v1137 = vpop.f32.mrf.mxu0
        %1138 = vmatprep.mubr.bf16.mxu0 %v523
        %1139 = vmatmul.mubr.bf16.gmra.mxu0 %v522
        %v1140 = vpop.f32.mrf.mxu0
        %v1141 = vadd.f32 0.0, %v1140
        %v1142 = vpop.f32.mrf.mxu0
        %v1143 = vpop.f32.mrf.mxu0
        %v1144 = vadd.f32 0.0, %v1143
        %v1145 = vpop.f32.mrf.mxu0
        %1146 = vmatprep.mubr.bf16.mxu0 %v526
        %1147 = vmatmul.mubr.bf16.gmra.mxu0 %v525
        %v1148 = vpop.f32.mrf.mxu0
        %v1149 = vadd.f32 0.0, %v1148
        %v1150 = vpop.f32.mrf.mxu0
        %v1151 = vpop.f32.mrf.mxu0
        %v1152 = vadd.f32 0.0, %v1151
        %v1153 = vpop.f32.mrf.mxu0
        %1154 = vmatprep.mubr.bf16.mxu0 %v529
        %1155 = vmatmul.mubr.bf16.gmra.mxu0 %v528
        %v1156 = vpop.f32.mrf.mxu0
        %v1157 = vadd.f32 0.0, %v1156
        %v1158 = vpop.f32.mrf.mxu0
        %v1159 = vpop.f32.mrf.mxu0
        %v1160 = vadd.f32 0.0, %v1159
        %v1161 = vpop.f32.mrf.mxu0
        %1162 = vmatprep.mubr.bf16.mxu0 %v532
        %1163 = vmatmul.mubr.bf16.gmra.mxu0 %v531
        %v1164 = vpop.f32.mrf.mxu0
        %v1165 = vadd.f32 0.0, %v1164
        %v1166 = vpop.f32.mrf.mxu0
        %v1167 = vpop.f32.mrf.mxu0
        %v1168 = vadd.f32 0.0, %v1167
        %v1169 = vpop.f32.mrf.mxu0
        %1170 = vmatprep.mubr.bf16.mxu0 %v535
        %1171 = vmatmul.mubr.bf16.gmra.mxu0 %v534
        %v1172 = vpop.f32.mrf.mxu0
        %v1173 = vadd.f32 0.0, %v1172
        %v1174 = vpop.f32.mrf.mxu0
        %v1175 = vpop.f32.mrf.mxu0
        %v1176 = vadd.f32 0.0, %v1175
        %v1177 = vpop.f32.mrf.mxu0
        %1178 = vmatprep.mubr.bf16.mxu0 %v538
        %1179 = vmatmul.mubr.bf16.gmra.mxu0 %v537
        %v1180 = vpop.f32.mrf.mxu0
        %v1181 = vadd.f32 0.0, %v1180
        %v1182 = vpop.f32.mrf.mxu0
        %v1183 = vpop.f32.mrf.mxu0
        %v1184 = vadd.f32 0.0, %v1183
        %v1185 = vpop.f32.mrf.mxu0
        %1186 = vmatprep.mubr.bf16.mxu0 %v541
        %1187 = vmatmul.mubr.bf16.gmra.mxu0 %v540
        %v1188 = vpop.f32.mrf.mxu0
        %v1189 = vadd.f32 0.0, %v1188
        %v1190 = vpop.f32.mrf.mxu0
        %v1191 = vpop.f32.mrf.mxu0
        %v1192 = vadd.f32 0.0, %v1191
        %v1193 = vpop.f32.mrf.mxu0
        %1194 = vdwg.mxu0
        %1195 = vmatprep.subr.bf16.mxu0 0
        %1196 = vmatpush1.bf16.msra.mxu0 0
        %1197 = vmatprep.subr.bf16.mxu0 0
        %1198 = vmatpush1.bf16.msra.mxu0 0
        %1199 = vmatprep.subr.bf16.mxu0 0
        %1200 = vmatpush1.bf16.msra.mxu0 0
        %1201 = vmatprep.subr.bf16.mxu0 0
        %1202 = vmatpush1.bf16.msra.mxu0 0
        %1203 = vmatprep.subr.bf16.mxu0 0
        %1204 = vmatpush1.bf16.msra.mxu0 0
        %1205 = vmatprep.subr.bf16.mxu0 0
        %1206 = vmatpush1.bf16.msra.mxu0 0
        %1207 = vmatprep.subr.bf16.mxu0 0
        %1208 = vmatpush1.bf16.msra.mxu0 %v792
        %1209 = vmatprep.subr.bf16.mxu0 0
        %1210 = vmatpush1.bf16.msra.mxu0 %v789
        %1211 = vmatprep.subr.bf16.mxu0 0
        %1212 = vmatpush2.bf16.msra.mxu0 0
        %1213 = vmatprep.subr.bf16.mxu0 0
        %1214 = vmatpush2.bf16.msra.mxu0 0
        %1215 = vmatprep.subr.bf16.mxu0 0
        %1216 = vmatpush2.bf16.msra.mxu0 0
        %1217 = vmatprep.subr.bf16.mxu0 0
        %1218 = vmatpush2.bf16.msra.mxu0 0
        %1219 = vmatprep.subr.bf16.mxu0 0
        %1220 = vmatpush2.bf16.msra.mxu0 0
        %1221 = vmatprep.subr.bf16.mxu0 0
        %1222 = vmatpush2.bf16.msra.mxu0 0
        %1223 = vmatprep.subr.bf16.mxu0 0
        %1224 = vmatpush2.bf16.msra.mxu0 0
        %1225 = vmatprep.subr.bf16.mxu0 0
        %1226 = vmatpush2.bf16.msra.mxu0 0
        %1227 = vmatprep.mubr.bf16.mxu0 0
        %1228 = vmatmul.mubr.bf16.gmra.mxu0 %v849
        %v1229 = vpop.f32.mrf.mxu0
        %v1230 = vadd.f32 %v1133, %v1229
        %v1231 = vpop.f32.mrf.mxu0
        %v1232 = vpop.f32.mrf.mxu0
        %v1233 = vadd.f32 %v1136, %v1232
        %v1234 = vpop.f32.mrf.mxu0
        %1235 = vmatprep.mubr.bf16.mxu0 0
        %1236 = vmatmul.mubr.bf16.gmra.mxu0 %v852
        %v1237 = vpop.f32.mrf.mxu0
        %v1238 = vadd.f32 %v1141, %v1237
        %v1239 = vpop.f32.mrf.mxu0
        %v1240 = vpop.f32.mrf.mxu0
        %v1241 = vadd.f32 %v1144, %v1240
        %v1242 = vpop.f32.mrf.mxu0
        %1243 = vmatprep.mubr.bf16.mxu0 0
        %1244 = vmatmul.mubr.bf16.gmra.mxu0 %v855
        %v1245 = vpop.f32.mrf.mxu0
        %v1246 = vadd.f32 %v1149, %v1245
        %v1247 = vpop.f32.mrf.mxu0
        %v1248 = vpop.f32.mrf.mxu0
        %v1249 = vadd.f32 %v1152, %v1248
        %v1250 = vpop.f32.mrf.mxu0
        %1251 = vmatprep.mubr.bf16.mxu0 0
        %1252 = vmatmul.mubr.bf16.gmra.mxu0 %v858
        %v1253 = vpop.f32.mrf.mxu0
        %v1254 = vadd.f32 %v1157, %v1253
        %v1255 = vpop.f32.mrf.mxu0
        %v1256 = vpop.f32.mrf.mxu0
        %v1257 = vadd.f32 %v1160, %v1256
        %v1258 = vpop.f32.mrf.mxu0
        %1259 = vmatprep.mubr.bf16.mxu0 0
        %1260 = vmatmul.mubr.bf16.gmra.mxu0 %v861
        %v1261 = vpop.f32.mrf.mxu0
        %v1262 = vadd.f32 %v1165, %v1261
        %v1263 = vpop.f32.mrf.mxu0
        %v1264 = vpop.f32.mrf.mxu0
        %v1265 = vadd.f32 %v1168, %v1264
        %v1266 = vpop.f32.mrf.mxu0
        %1267 = vmatprep.mubr.bf16.mxu0 0
        %1268 = vmatmul.mubr.bf16.gmra.mxu0 %v864
        %v1269 = vpop.f32.mrf.mxu0
        %v1270 = vadd.f32 %v1173, %v1269
        %v1271 = vpop.f32.mrf.mxu0
        %v1272 = vpop.f32.mrf.mxu0
        %v1273 = vadd.f32 %v1176, %v1272
        %v1274 = vpop.f32.mrf.mxu0
        %1275 = vmatprep.mubr.bf16.mxu0 0
        %1276 = vmatmul.mubr.bf16.gmra.mxu0 %v867
        %v1277 = vpop.f32.mrf.mxu0
        %v1278 = vadd.f32 %v1181, %v1277
        %v1279 = vpop.f32.mrf.mxu0
        %v1280 = vpop.f32.mrf.mxu0
        %v1281 = vadd.f32 %v1184, %v1280
        %v1282 = vpop.f32.mrf.mxu0
        %1283 = vmatprep.mubr.bf16.mxu0 0
        %1284 = vmatmul.mubr.bf16.gmra.mxu0 %v870
        %v1285 = vpop.f32.mrf.mxu0
        %v1286 = vadd.f32 %v1189, %v1285
        %v1287 = vpop.f32.mrf.mxu0
        %v1288 = vpop.f32.mrf.mxu0
        %v1289 = vadd.f32 %v1192, %v1288
        %v1290 = vpop.f32.mrf.mxu0
        %1291 = vdwg.mxu0
        %v1292 = vld [vmem:[%s213] sm:$0xff]
        %v1293 = vld [vmem:[%s213 + $0x8] sm:$0xf]
        %v1294 = vld [vmem:[%s213 + $0xc] sm:$0xff]
        %v1295 = vld [vmem:[%s213 + $0x14] sm:$0xf]
        %v1296 = vld [vmem:[%s213 + $0x18] sm:$0xff]
        %v1297 = vld [vmem:[%s213 + $0x20] sm:$0xf]
        %v1298 = vld [vmem:[%s213 + $0x24] sm:$0xff]
        %v1299 = vld [vmem:[%s213 + $0x2c] sm:$0xf]
        %v1300 = vunpack.c.l.bf16 %v1292
        %v1301 = vunpack.c.h.bf16 %v1292
        %v1302 = vunpack.c.l.bf16 %v1293
        %v1303 = vunpack.c.l.bf16 %v1294
        %v1304 = vunpack.c.h.bf16 %v1294
        %v1305 = vunpack.c.l.bf16 %v1295
        %v1306 = vunpack.c.l.bf16 %v1296
        %v1307 = vunpack.c.h.bf16 %v1296
        %v1308 = vunpack.c.l.bf16 %v1297
        %v1309 = vunpack.c.l.bf16 %v1298
        %v1310 = vunpack.c.h.bf16 %v1298
        %v1311 = vunpack.c.l.bf16 %v1299
        %v1312 = vadd.f32 %v1020, %v1300
        %v1313 = vadd.f32 %v1022, %v1301
        %v1314 = vadd.f32 %v1230, %v1302
        %v1315 = vadd.f32 %v1024, %v1303
        %v1316 = vadd.f32 %v1026, %v1304
        %v1317 = vadd.f32 %v1233, %v1305
        %v1318 = vadd.f32 %v1030, %v1306
        %v1319 = vadd.f32 %v1032, %v1307
        %v1320 = vadd.f32 %v1238, %v1308
        %v1321 = vadd.f32 %v1034, %v1309
        %v1322 = vadd.f32 %v1036, %v1310
        %v1323 = vadd.f32 %v1241, %v1311
        %v1324 = vmul.f32 %v1312, 0.5
        %v1325 = vmul.f32 %v1313, 0.5
        %v1326 = vmul.f32 %v1314, 0.5
        %v1327 = vmul.f32 %v1315, 0.5
        %v1328 = vmul.f32 %v1316, 0.5
        %v1329 = vmul.f32 %v1317, 0.5
        %v1330 = vmul.f32 %v1318, 0.5
        %v1331 = vmul.f32 %v1319, 0.5
        %v1332 = vmul.f32 %v1320, 0.5
        %v1333 = vmul.f32 %v1321, 0.5
        %v1334 = vmul.f32 %v1322, 0.5
        %v1335 = vmul.f32 %v1323, 0.5
        %v1336 = vtanh.pop %v1324
        %v1337 = vtanh.pop %v1325
        %v1338 = vtanh.pop %v1326
        %v1339 = vtanh.pop %v1327
        %v1340 = vtanh.pop %v1328
        %v1341 = vtanh.pop %v1329
        %v1342 = vtanh.pop %v1330
        %v1343 = vtanh.pop %v1331
        %v1344 = vtanh.pop %v1332
        %v1345 = vtanh.pop %v1333
        %v1346 = vtanh.pop %v1334
        %v1347 = vtanh.pop %v1335
        %v1348 = vmul.f32 %v1336, 0.5
        %v1349 = vmul.f32 %v1337, 0.5
        %v1350 = vmul.f32 %v1338, 0.5
        %v1351 = vmul.f32 %v1339, 0.5
        %v1352 = vmul.f32 %v1340, 0.5
        %v1353 = vmul.f32 %v1341, 0.5
        %v1354 = vmul.f32 %v1342, 0.5
        %v1355 = vmul.f32 %v1343, 0.5
        %v1356 = vmul.f32 %v1344, 0.5
        %v1357 = vmul.f32 %v1345, 0.5
        %v1358 = vmul.f32 %v1346, 0.5
        %v1359 = vmul.f32 %v1347, 0.5
        %v1360 = vadd.f32 %v1348, 0.5
        %v1361 = vadd.f32 %v1349, 0.5
        %v1362 = vadd.f32 %v1350, 0.5
        %v1363 = vadd.f32 %v1351, 0.5
        %v1364 = vadd.f32 %v1352, 0.5
        %v1365 = vadd.f32 %v1353, 0.5
        %v1366 = vadd.f32 %v1354, 0.5
        %v1367 = vadd.f32 %v1355, 0.5
        %v1368 = vadd.f32 %v1356, 0.5
        %v1369 = vadd.f32 %v1357, 0.5
        %v1370 = vadd.f32 %v1358, 0.5
        %v1371 = vadd.f32 %v1359, 0.5
        %v1372 = vld [vmem:[%s213 + $0x30] sm:$0xff]
        %v1373 = vld [vmem:[%s213 + $0x38] sm:$0xf]
        %v1374 = vld [vmem:[%s213 + $0x3c] sm:$0xff]
        %v1375 = vld [vmem:[%s213 + $0x44] sm:$0xf]
        %v1376 = vld [vmem:[%s213 + $0x48] sm:$0xff]
        %v1377 = vld [vmem:[%s213 + $0x50] sm:$0xf]
        %v1378 = vld [vmem:[%s213 + $0x54] sm:$0xff]
        %v1379 = vld [vmem:[%s213 + $0x5c] sm:$0xf]
        %v1380 = vunpack.c.l.bf16 %v1372
        %v1381 = vunpack.c.h.bf16 %v1372
        %v1382 = vunpack.c.l.bf16 %v1373
        %v1383 = vunpack.c.l.bf16 %v1374
        %v1384 = vunpack.c.h.bf16 %v1374
        %v1385 = vunpack.c.l.bf16 %v1375
        %v1386 = vunpack.c.l.bf16 %v1376
        %v1387 = vunpack.c.h.bf16 %v1376
        %v1388 = vunpack.c.l.bf16 %v1377
        %v1389 = vunpack.c.l.bf16 %v1378
        %v1390 = vunpack.c.h.bf16 %v1378
        %v1391 = vunpack.c.l.bf16 %v1379
        %v1392 = vadd.f32 %v1040, %v1380
        %v1393 = vadd.f32 %v1042, %v1381
        %v1394 = vadd.f32 %v1246, %v1382
        %v1395 = vadd.f32 %v1044, %v1383
        %v1396 = vadd.f32 %v1046, %v1384
        %v1397 = vadd.f32 %v1249, %v1385
        %v1398 = vadd.f32 %v1050, %v1386
        %v1399 = vadd.f32 %v1052, %v1387
        %v1400 = vadd.f32 %v1254, %v1388
        %v1401 = vadd.f32 %v1054, %v1389
        %v1402 = vadd.f32 %v1056, %v1390
        %v1403 = vadd.f32 %v1257, %v1391
        %v1404 = vmul.f32 %v1392, 0.5
        %v1405 = vmul.f32 %v1393, 0.5
        %v1406 = vmul.f32 %v1394, 0.5
        %v1407 = vmul.f32 %v1395, 0.5
        %v1408 = vmul.f32 %v1396, 0.5
        %v1409 = vmul.f32 %v1397, 0.5
        %v1410 = vmul.f32 %v1398, 0.5
        %v1411 = vmul.f32 %v1399, 0.5
        %v1412 = vmul.f32 %v1400, 0.5
        %v1413 = vmul.f32 %v1401, 0.5
        %v1414 = vmul.f32 %v1402, 0.5
        %v1415 = vmul.f32 %v1403, 0.5
        %v1416 = vtanh.pop %v1404
        %v1417 = vtanh.pop %v1405
        %v1418 = vtanh.pop %v1406
        %v1419 = vtanh.pop %v1407
        %v1420 = vtanh.pop %v1408
        %v1421 = vtanh.pop %v1409
        %v1422 = vtanh.pop %v1410
        %v1423 = vtanh.pop %v1411
        %v1424 = vtanh.pop %v1412
        %v1425 = vtanh.pop %v1413
        %v1426 = vtanh.pop %v1414
        %v1427 = vtanh.pop %v1415
        %v1428 = vmul.f32 %v1416, 0.5
        %v1429 = vmul.f32 %v1417, 0.5
        %v1430 = vmul.f32 %v1418, 0.5
        %v1431 = vmul.f32 %v1419, 0.5
        %v1432 = vmul.f32 %v1420, 0.5
        %v1433 = vmul.f32 %v1421, 0.5
        %v1434 = vmul.f32 %v1422, 0.5
        %v1435 = vmul.f32 %v1423, 0.5
        %v1436 = vmul.f32 %v1424, 0.5
        %v1437 = vmul.f32 %v1425, 0.5
        %v1438 = vmul.f32 %v1426, 0.5
        %v1439 = vmul.f32 %v1427, 0.5
        %v1440 = vadd.f32 %v1428, 0.5
        %v1441 = vadd.f32 %v1429, 0.5
        %v1442 = vadd.f32 %v1430, 0.5
        %v1443 = vadd.f32 %v1431, 0.5
        %v1444 = vadd.f32 %v1432, 0.5
        %v1445 = vadd.f32 %v1433, 0.5
        %v1446 = vadd.f32 %v1434, 0.5
        %v1447 = vadd.f32 %v1435, 0.5
        %v1448 = vadd.f32 %v1436, 0.5
        %v1449 = vadd.f32 %v1437, 0.5
        %v1450 = vadd.f32 %v1438, 0.5
        %v1451 = vadd.f32 %v1439, 0.5
        %v1452 = vld [vmem:[%s213 + $0x60] sm:$0xff]
        %v1453 = vld [vmem:[%s213 + $0x68] sm:$0xf]
        %v1454 = vld [vmem:[%s213 + $0x6c] sm:$0xff]
        %v1455 = vld [vmem:[%s213 + $0x74] sm:$0xf]
        %v1456 = vld [vmem:[%s213 + $0x78] sm:$0xff]
        %v1457 = vld [vmem:[%s213 + $0x80] sm:$0xf]
        %v1458 = vld [vmem:[%s213 + $0x84] sm:$0xff]
        %v1459 = vld [vmem:[%s213 + $0x8c] sm:$0xf]
        %v1460 = vunpack.c.l.bf16 %v1452
        %v1461 = vunpack.c.h.bf16 %v1452
        %v1462 = vunpack.c.l.bf16 %v1453
        %v1463 = vunpack.c.l.bf16 %v1454
        %v1464 = vunpack.c.h.bf16 %v1454
        %v1465 = vunpack.c.l.bf16 %v1455
        %v1466 = vunpack.c.l.bf16 %v1456
        %v1467 = vunpack.c.h.bf16 %v1456
        %v1468 = vunpack.c.l.bf16 %v1457
        %v1469 = vunpack.c.l.bf16 %v1458
        %v1470 = vunpack.c.h.bf16 %v1458
        %v1471 = vunpack.c.l.bf16 %v1459
        %v1472 = vadd.f32 %v1060, %v1460
        %v1473 = vadd.f32 %v1062, %v1461
        %v1474 = vadd.f32 %v1262, %v1462
        %v1475 = vadd.f32 %v1064, %v1463
        %v1476 = vadd.f32 %v1066, %v1464
        %v1477 = vadd.f32 %v1265, %v1465
        %v1478 = vadd.f32 %v1070, %v1466
        %v1479 = vadd.f32 %v1072, %v1467
        %v1480 = vadd.f32 %v1270, %v1468
        %v1481 = vadd.f32 %v1074, %v1469
        %v1482 = vadd.f32 %v1076, %v1470
        %v1483 = vadd.f32 %v1273, %v1471
        %v1484 = vmul.f32 %v1472, 0.5
        %v1485 = vmul.f32 %v1473, 0.5
        %v1486 = vmul.f32 %v1474, 0.5
        %v1487 = vmul.f32 %v1475, 0.5
        %v1488 = vmul.f32 %v1476, 0.5
        %v1489 = vmul.f32 %v1477, 0.5
        %v1490 = vmul.f32 %v1478, 0.5
        %v1491 = vmul.f32 %v1479, 0.5
        %v1492 = vmul.f32 %v1480, 0.5
        %v1493 = vmul.f32 %v1481, 0.5
        %v1494 = vmul.f32 %v1482, 0.5
        %v1495 = vmul.f32 %v1483, 0.5
        %v1496 = vtanh.pop %v1484
        %v1497 = vtanh.pop %v1485
        %v1498 = vtanh.pop %v1486
        %v1499 = vtanh.pop %v1487
        %v1500 = vtanh.pop %v1488
        %v1501 = vtanh.pop %v1489
        %v1502 = vtanh.pop %v1490
        %v1503 = vtanh.pop %v1491
        %v1504 = vtanh.pop %v1492
        %v1505 = vtanh.pop %v1493
        %v1506 = vtanh.pop %v1494
        %v1507 = vtanh.pop %v1495
        %v1508 = vmul.f32 %v1496, 0.5
        %v1509 = vmul.f32 %v1497, 0.5
        %v1510 = vmul.f32 %v1498, 0.5
        %v1511 = vmul.f32 %v1499, 0.5
        %v1512 = vmul.f32 %v1500, 0.5
        %v1513 = vmul.f32 %v1501, 0.5
        %v1514 = vmul.f32 %v1502, 0.5
        %v1515 = vmul.f32 %v1503, 0.5
        %v1516 = vmul.f32 %v1504, 0.5
        %v1517 = vmul.f32 %v1505, 0.5
        %v1518 = vmul.f32 %v1506, 0.5
        %v1519 = vmul.f32 %v1507, 0.5
        %v1520 = vadd.f32 %v1508, 0.5
        %v1521 = vadd.f32 %v1509, 0.5
        %v1522 = vadd.f32 %v1510, 0.5
        %v1523 = vadd.f32 %v1511, 0.5
        %v1524 = vadd.f32 %v1512, 0.5
        %v1525 = vadd.f32 %v1513, 0.5
        %v1526 = vadd.f32 %v1514, 0.5
        %v1527 = vadd.f32 %v1515, 0.5
        %v1528 = vadd.f32 %v1516, 0.5
        %v1529 = vadd.f32 %v1517, 0.5
        %v1530 = vadd.f32 %v1518, 0.5
        %v1531 = vadd.f32 %v1519, 0.5
        %v1532 = vld [vmem:[%s213 + $0x90] sm:$0xff]
        %v1533 = vld [vmem:[%s213 + $0x98] sm:$0xf]
        %v1534 = vld [vmem:[%s213 + $0x9c] sm:$0xff]
        %v1535 = vld [vmem:[%s213 + $0xa4] sm:$0xf]
        %v1536 = vld [vmem:[%s213 + $0xa8] sm:$0xff]
        %v1537 = vld [vmem:[%s213 + $0xb0] sm:$0xf]
        %v1538 = vld [vmem:[%s213 + $0xb4] sm:$0xff]
        %v1539 = vld [vmem:[%s213 + $0xbc] sm:$0xf]
        %v1540 = vunpack.c.l.bf16 %v1532
        %v1541 = vunpack.c.h.bf16 %v1532
        %v1542 = vunpack.c.l.bf16 %v1533
        %v1543 = vunpack.c.l.bf16 %v1534
        %v1544 = vunpack.c.h.bf16 %v1534
        %v1545 = vunpack.c.l.bf16 %v1535
        %v1546 = vunpack.c.l.bf16 %v1536
        %v1547 = vunpack.c.h.bf16 %v1536
        %v1548 = vunpack.c.l.bf16 %v1537
        %v1549 = vunpack.c.l.bf16 %v1538
        %v1550 = vunpack.c.h.bf16 %v1538
        %v1551 = vunpack.c.l.bf16 %v1539
        %v1552 = vadd.f32 %v1080, %v1540
        %v1553 = vadd.f32 %v1082, %v1541
        %v1554 = vadd.f32 %v1278, %v1542
        %v1555 = vadd.f32 %v1084, %v1543
        %v1556 = vadd.f32 %v1086, %v1544
        %v1557 = vadd.f32 %v1281, %v1545
        %v1558 = vadd.f32 %v1090, %v1546
        %v1559 = vadd.f32 %v1092, %v1547
        %v1560 = vadd.f32 %v1286, %v1548
        %v1561 = vadd.f32 %v1094, %v1549
        %v1562 = vadd.f32 %v1096, %v1550
        %v1563 = vadd.f32 %v1289, %v1551
        %v1564 = vtanh.pop %v1552
        %v1565 = vtanh.pop %v1553
        %v1566 = vtanh.pop %v1554
        %v1567 = vtanh.pop %v1555
        %v1568 = vtanh.pop %v1556
        %v1569 = vtanh.pop %v1557
        %v1570 = vtanh.pop %v1558
        %v1571 = vtanh.pop %v1559
        %v1572 = vtanh.pop %v1560
        %v1573 = vtanh.pop %v1561
        %v1574 = vtanh.pop %v1562
        %v1575 = vtanh.pop %v1563
        %v1576 = vld [vmem:[#allocation3] sm:$0xff]
        %v1577 = vld [vmem:[#allocation3 + $0x8] sm:$0xff]
        %v1578 = vld [vmem:[#allocation3 + $0x10] sm:$0xff]
        %v1579 = vld [vmem:[#allocation3 + $0x18] sm:$0xff]
        %v1580 = vld [vmem:[#allocation3 + $0x20] sm:$0xff]
        %v1581 = vld [vmem:[#allocation3 + $0x28] sm:$0xff]
        %v1582 = vld [vmem:[#allocation3 + $0x30] sm:$0xff]
        %v1583 = vld [vmem:[#allocation3 + $0x38] sm:$0xff]
        %v1584 = vld [vmem:[#allocation3 + $0x40] sm:$0xff]
        %v1585 = vld [vmem:[#allocation3 + $0x48] sm:$0xff]
        %v1586 = vld [vmem:[#allocation3 + $0x50] sm:$0xff]
        %v1587 = vld [vmem:[#allocation3 + $0x58] sm:$0xff]
        %v1588 = vmul.f32 %v1440, %v1576
        %v1589 = vmul.f32 %v1441, %v1577
        %v1590 = vmul.f32 %v1442, %v1578
        %v1591 = vmul.f32 %v1443, %v1579
        %v1592 = vmul.f32 %v1444, %v1580
        %v1593 = vmul.f32 %v1445, %v1581
        %v1594 = vmul.f32 %v1446, %v1582
        %v1595 = vmul.f32 %v1447, %v1583
        %v1596 = vmul.f32 %v1448, %v1584
        %v1597 = vmul.f32 %v1449, %v1585
        %v1598 = vmul.f32 %v1450, %v1586
        %v1599 = vmul.f32 %v1451, %v1587
        %v1600 = vmul.f32 %v1360, %v1564
        %v1601 = vmul.f32 %v1361, %v1565
        %v1602 = vmul.f32 %v1362, %v1566
        %v1603 = vmul.f32 %v1363, %v1567
        %v1604 = vmul.f32 %v1364, %v1568
        %v1605 = vmul.f32 %v1365, %v1569
        %v1606 = vmul.f32 %v1366, %v1570
        %v1607 = vmul.f32 %v1367, %v1571
        %v1608 = vmul.f32 %v1368, %v1572
        %v1609 = vmul.f32 %v1369, %v1573
        %v1610 = vmul.f32 %v1370, %v1574
        %v1611 = vmul.f32 %v1371, %v1575
        %v1612 = vadd.f32 %v1588, %v1600
        %v1613 = vadd.f32 %v1589, %v1601
        %v1614 = vadd.f32 %v1590, %v1602
        %v1615 = vadd.f32 %v1591, %v1603
        %v1616 = vadd.f32 %v1592, %v1604
        %v1617 = vadd.f32 %v1593, %v1605
        %v1618 = vadd.f32 %v1594, %v1606
        %v1619 = vadd.f32 %v1595, %v1607
        %v1620 = vadd.f32 %v1596, %v1608
        %v1621 = vadd.f32 %v1597, %v1609
        %v1622 = vadd.f32 %v1598, %v1610
        %v1623 = vadd.f32 %v1599, %v1611
        %v1624 = vtanh.pop %v1612
        %v1625 = vtanh.pop %v1613
        %v1626 = vtanh.pop %v1614
        %v1627 = vtanh.pop %v1615
        %v1628 = vtanh.pop %v1616
        %v1629 = vtanh.pop %v1617
        %v1630 = vtanh.pop %v1618
        %v1631 = vtanh.pop %v1619
        %v1632 = vtanh.pop %v1620
        %v1633 = vtanh.pop %v1621
        %v1634 = vtanh.pop %v1622
        %v1635 = vtanh.pop %v1623
        %v1636 = vmul.f32 %v1520, %v1624
        %v1637 = vmul.f32 %v1521, %v1625
        %v1638 = vmul.f32 %v1522, %v1626
        %v1639 = vmul.f32 %v1523, %v1627
        %v1640 = vmul.f32 %v1524, %v1628
        %v1641 = vmul.f32 %v1525, %v1629
        %v1642 = vmul.f32 %v1526, %v1630
        %v1643 = vmul.f32 %v1527, %v1631
        %v1644 = vmul.f32 %v1528, %v1632
        %v1645 = vmul.f32 %v1529, %v1633
        %v1646 = vmul.f32 %v1530, %v1634
        %v1647 = vmul.f32 %v1531, %v1635
        %1648 = vst [vmem:[#allocation3] sm:$0xff] %v1612
        %1649 = vst [vmem:[#allocation3 + $0x8] sm:$0xff] %v1613
        %1650 = vst [vmem:[#allocation3 + $0x10] sm:$0xff] %v1614
        %1651 = vst [vmem:[#allocation3 + $0x18] sm:$0xff] %v1615
        %1652 = vst [vmem:[#allocation3 + $0x20] sm:$0xff] %v1616
        %1653 = vst [vmem:[#allocation3 + $0x28] sm:$0xff] %v1617
        %1654 = vst [vmem:[#allocation3 + $0x30] sm:$0xff] %v1618
        %1655 = vst [vmem:[#allocation3 + $0x38] sm:$0xff] %v1619
        %1656 = vst [vmem:[#allocation3 + $0x40] sm:$0xff] %v1620
        %1657 = vst [vmem:[#allocation3 + $0x48] sm:$0xff] %v1621
        %1658 = vst [vmem:[#allocation3 + $0x50] sm:$0xff] %v1622
        %1659 = vst [vmem:[#allocation3 + $0x58] sm:$0xff] %v1623
        %v1660 = vld [vmem:[%s2] sm:$0xff]
        %v1661 = vld [vmem:[%s2 + $0x8] sm:$0xff]
        %v1662 = vld [vmem:[%s2 + $0x10] sm:$0xff]
        %v1663 = vld [vmem:[%s2 + $0x18] sm:$0xff]
        %v1664 = vld [vmem:[%s2 + $0x20] sm:$0xff]
        %v1665 = vld [vmem:[%s2 + $0x28] sm:$0xff]
        %v1666 = vld [vmem:[%s2 + $0x30] sm:$0xff]
        %v1667 = vld [vmem:[%s2 + $0x38] sm:$0xff]
        %v1668 = vld [vmem:[%s2 + $0x40] sm:$0xff]
        %v1669 = vld [vmem:[%s2 + $0x48] sm:$0xff]
        %v1670 = vld [vmem:[%s2 + $0x50] sm:$0xff]
        %v1671 = vld [vmem:[%s2 + $0x58] sm:$0xff]
        %v1672 = vmul.f32 %v1636, %v1660
        %v1673 = vmul.f32 %v1637, %v1661
        %v1674 = vmul.f32 %v1638, %v1662
        %v1675 = vmul.f32 %v1639, %v1663
        %v1676 = vmul.f32 %v1640, %v1664
        %v1677 = vmul.f32 %v1641, %v1665
        %v1678 = vmul.f32 %v1642, %v1666
        %v1679 = vmul.f32 %v1643, %v1667
        %v1680 = vmul.f32 %v1644, %v1668
        %v1681 = vmul.f32 %v1645, %v1669
        %v1682 = vmul.f32 %v1646, %v1670
        %v1683 = vmul.f32 %v1647, %v1671
        %1684 = vrot.lane.b32.xlu0 %v1672, 19
        %v1685 = vpop.permute.xlu0 %1684
        %1686 = vrot.lane.b32.xlu0 %v1675, 19
        %v1687 = vpop.permute.xlu0 %1686
        %1688 = vrot.lane.b32.xlu0 %v1678, 19
        %v1689 = vpop.permute.xlu0 %1688
        %1690 = vrot.lane.b32.xlu0 %v1681, 19
        %v1691 = vpop.permute.xlu0 %1690
        %1692 = vrot.lane.b32.xlu0 %v1673, 19
        %v1693 = vpop.permute.xlu0 %1692
        %1694 = vrot.lane.b32.xlu0 %v1676, 19
        %v1695 = vpop.permute.xlu0 %1694
        %1696 = vrot.lane.b32.xlu0 %v1679, 19
        %v1697 = vpop.permute.xlu0 %1696
        %1698 = vrot.lane.b32.xlu0 %v1682, 19
        %v1699 = vpop.permute.xlu0 %1698
        %1700 = vrot.lane.b32.xlu0 %v1674, 19
        %v1701 = vpop.permute.xlu0 %1700
        %1702 = vrot.lane.b32.xlu0 %v1677, 19
        %v1703 = vpop.permute.xlu0 %1702
        %1704 = vrot.lane.b32.xlu0 %v1680, 19
        %v1705 = vpop.permute.xlu0 %1704
        %1706 = vrot.lane.b32.xlu0 %v1683, 19
        %v1707 = vpop.permute.xlu0 %1706
        %v1708 = vlaneseq
        %v1709 = vand.u32 %v1708, 127
        %vm1710 = vcmp.lt.s32.totalorder %v1709, 19
        %v1711 = vsel %vm1710, %v1693, %v1701
        %v1712 = vsel %vm1710, %v1695, %v1703
        %v1713 = vsel %vm1710, %v1697, %v1705
        %v1714 = vsel %vm1710, %v1699, %v1707
        %v1715 = vsel %vm1710, %v1685, %v1693
        %v1716 = vsel %vm1710, %v1687, %v1695
        %v1717 = vsel %vm1710, %v1689, %v1697
        %v1718 = vsel %vm1710, %v1691, %v1699
        %v1719 = vsel %vm1710, %v1701, %v1685
        %v1720 = vsel %vm1710, %v1703, %v1687
        %v1721 = vsel %vm1710, %v1705, %v1689
        %v1722 = vsel %vm1710, %v1707, %v1691
        %v1723 = vpack.c.bf16 %v1720, %v1719
        %v1724 = vpack.c.bf16 %v1716, %v1715
        %v1725 = vpack.c.bf16 %v1712, %v1711
        %v1726 = vpack.c.bf16 %v1722, %v1721
        %v1727 = vpack.c.bf16 %v1718, %v1717
        %v1728 = vpack.c.bf16 %v1714, %v1713
        %v1735 = vunpack.c.l.b16 %v1723
        %v1736 = vunpack.c.l.b16 %v1724
        %v1737 = vunpack.c.l.b16 %v1725
        %v1738 = vunpack.c.h.b16 %v1723
        %v1739 = vunpack.c.h.b16 %v1724
        %v1740 = vunpack.c.h.b16 %v1725
        %v1741 = vunpack.c.l.b16 %v1726
        %v1742 = vunpack.c.l.b16 %v1727
        %v1743 = vunpack.c.l.b16 %v1728
        %v1744 = vunpack.c.h.b16 %v1726
        %v1745 = vunpack.c.h.b16 %v1727
        %v1746 = vunpack.c.h.b16 %v1728
        %v1747 = vpack.c.b16 %v1736, %v1735
        %v1748 = vpack.c.b16 %v1737, %v1737
        %v1749 = vpack.c.b16 %v1739, %v1738
        %v1750 = vpack.c.b16 %v1740, %v1740
        %v1751 = vpack.c.b16 %v1742, %v1741
        %v1752 = vpack.c.b16 %v1743, %v1743
        %v1753 = vpack.c.b16 %v1745, %v1744
        %v1754 = vpack.c.b16 %v1746, %v1746
        %1763 = vst [vmem:[#allocation2] sm:$0xff] %v1747
        %1764 = vst [vmem:[#allocation2 + $0x8] sm:$0xf] %v1748
        %1765 = vst [vmem:[#allocation2 + $0xc] sm:$0xff] %v1749
        %1766 = vst [vmem:[#allocation2 + $0x14] sm:$0xf] %v1750
        %1767 = vst [vmem:[#allocation2 + $0x18] sm:$0xff] %v1751
        %1768 = vst [vmem:[#allocation2 + $0x20] sm:$0xf] %v1752
        %1769 = vst [vmem:[#allocation2 + $0x24] sm:$0xff] %v1753
        %1770 = vst [vmem:[#allocation2 + $0x2c] sm:$0xf] %v1754
        %1771 = vrot.lane.b32.xlu0 %v1672, 18
        %v1772 = vpop.permute.xlu0 %1771
        %1773 = vrot.lane.b32.xlu0 %v1675, 18
        %v1774 = vpop.permute.xlu0 %1773
        %1775 = vrot.lane.b32.xlu0 %v1678, 18
        %v1776 = vpop.permute.xlu0 %1775
        %1777 = vrot.lane.b32.xlu0 %v1681, 18
        %v1778 = vpop.permute.xlu0 %1777
        %1779 = vrot.lane.b32.xlu0 %v1673, 18
        %v1780 = vpop.permute.xlu0 %1779
        %1781 = vrot.lane.b32.xlu0 %v1676, 18
        %v1782 = vpop.permute.xlu0 %1781
        %1783 = vrot.lane.b32.xlu0 %v1679, 18
        %v1784 = vpop.permute.xlu0 %1783
        %1785 = vrot.lane.b32.xlu0 %v1682, 18
        %v1786 = vpop.permute.xlu0 %1785
        %1787 = vrot.lane.b32.xlu0 %v1674, 18
        %v1788 = vpop.permute.xlu0 %1787
        %1789 = vrot.lane.b32.xlu0 %v1677, 18
        %v1790 = vpop.permute.xlu0 %1789
        %1791 = vrot.lane.b32.xlu0 %v1680, 18
        %v1792 = vpop.permute.xlu0 %1791
        %1793 = vrot.lane.b32.xlu0 %v1683, 18
        %v1794 = vpop.permute.xlu0 %1793
        %vm1795 = vcmp.lt.s32.totalorder %v1709, 18
        %v1796 = vsel %vm1795, %v1780, %v1788
        %v1797 = vsel %vm1795, %v1782, %v1790
        %v1798 = vsel %vm1795, %v1784, %v1792
        %v1799 = vsel %vm1795, %v1786, %v1794
        %v1800 = vsel %vm1795, %v1772, %v1780
        %v1801 = vsel %vm1795, %v1774, %v1782
        %v1802 = vsel %vm1795, %v1776, %v1784
        %v1803 = vsel %vm1795, %v1778, %v1786
        %v1804 = vsel %vm1795, %v1788, %v1772
        %v1805 = vsel %vm1795, %v1790, %v1774
        %v1806 = vsel %vm1795, %v1792, %v1776
        %v1807 = vsel %vm1795, %v1794, %v1778
        %v1808 = vpack.c.bf16 %v1805, %v1804
        %v1809 = vpack.c.bf16 %v1801, %v1800
        %v1810 = vpack.c.bf16 %v1797, %v1796
        %v1811 = vpack.c.bf16 %v1807, %v1806
        %v1812 = vpack.c.bf16 %v1803, %v1802
        %v1813 = vpack.c.bf16 %v1799, %v1798
        %v1820 = vunpack.c.l.b16 %v1808
        %v1821 = vunpack.c.l.b16 %v1809
        %v1822 = vunpack.c.l.b16 %v1810
        %v1823 = vunpack.c.h.b16 %v1808
        %v1824 = vunpack.c.h.b16 %v1809
        %v1825 = vunpack.c.h.b16 %v1810
        %v1826 = vunpack.c.l.b16 %v1811
        %v1827 = vunpack.c.l.b16 %v1812
        %v1828 = vunpack.c.l.b16 %v1813
        %v1829 = vunpack.c.h.b16 %v1811
        %v1830 = vunpack.c.h.b16 %v1812
        %v1831 = vunpack.c.h.b16 %v1813
        %v1832 = vpack.c.b16 %v1821, %v1820
        %v1833 = vpack.c.b16 %v1822, %v1822
        %v1834 = vpack.c.b16 %v1824, %v1823
        %v1835 = vpack.c.b16 %v1825, %v1825
        %v1836 = vpack.c.b16 %v1827, %v1826
        %v1837 = vpack.c.b16 %v1828, %v1828
        %v1838 = vpack.c.b16 %v1830, %v1829
        %v1839 = vpack.c.b16 %v1831, %v1831
        %1848 = vst [vmem:[#allocation2 + $0x30] sm:$0xff] %v1832
        %1849 = vst [vmem:[#allocation2 + $0x38] sm:$0xf] %v1833
        %1850 = vst [vmem:[#allocation2 + $0x3c] sm:$0xff] %v1834
        %1851 = vst [vmem:[#allocation2 + $0x44] sm:$0xf] %v1835
        %1852 = vst [vmem:[#allocation2 + $0x48] sm:$0xff] %v1836
        %1853 = vst [vmem:[#allocation2 + $0x50] sm:$0xf] %v1837
        %1854 = vst [vmem:[#allocation2 + $0x54] sm:$0xff] %v1838
        %1855 = vst [vmem:[#allocation2 + $0x5c] sm:$0xf] %v1839
        %1856 = vrot.lane.b32.xlu0 %v1672, 17
        %v1857 = vpop.permute.xlu0 %1856
        %1858 = vrot.lane.b32.xlu0 %v1675, 17
        %v1859 = vpop.permute.xlu0 %1858
        %1860 = vrot.lane.b32.xlu0 %v1678, 17
        %v1861 = vpop.permute.xlu0 %1860
        %1862 = vrot.lane.b32.xlu0 %v1681, 17
        %v1863 = vpop.permute.xlu0 %1862
        %1864 = vrot.lane.b32.xlu0 %v1673, 17
        %v1865 = vpop.permute.xlu0 %1864
        %1866 = vrot.lane.b32.xlu0 %v1676, 17
        %v1867 = vpop.permute.xlu0 %1866
        %1868 = vrot.lane.b32.xlu0 %v1679, 17
        %v1869 = vpop.permute.xlu0 %1868
        %1870 = vrot.lane.b32.xlu0 %v1682, 17
        %v1871 = vpop.permute.xlu0 %1870
        %1872 = vrot.lane.b32.xlu0 %v1674, 17
        %v1873 = vpop.permute.xlu0 %1872
        %1874 = vrot.lane.b32.xlu0 %v1677, 17
        %v1875 = vpop.permute.xlu0 %1874
        %1876 = vrot.lane.b32.xlu0 %v1680, 17
        %v1877 = vpop.permute.xlu0 %1876
        %1878 = vrot.lane.b32.xlu0 %v1683, 17
        %v1879 = vpop.permute.xlu0 %1878
        %vm1880 = vcmp.lt.s32.totalorder %v1709, 17
        %v1881 = vsel %vm1880, %v1865, %v1873
        %v1882 = vsel %vm1880, %v1867, %v1875
        %v1883 = vsel %vm1880, %v1869, %v1877
        %v1884 = vsel %vm1880, %v1871, %v1879
        %v1885 = vsel %vm1880, %v1857, %v1865
        %v1886 = vsel %vm1880, %v1859, %v1867
        %v1887 = vsel %vm1880, %v1861, %v1869
        %v1888 = vsel %vm1880, %v1863, %v1871
        %v1889 = vsel %vm1880, %v1873, %v1857
        %v1890 = vsel %vm1880, %v1875, %v1859
        %v1891 = vsel %vm1880, %v1877, %v1861
        %v1892 = vsel %vm1880, %v1879, %v1863
        %v1893 = vpack.c.bf16 %v1890, %v1889
        %v1894 = vpack.c.bf16 %v1886, %v1885
        %v1895 = vpack.c.bf16 %v1882, %v1881
        %v1896 = vpack.c.bf16 %v1892, %v1891
        %v1897 = vpack.c.bf16 %v1888, %v1887
        %v1898 = vpack.c.bf16 %v1884, %v1883
        %v1905 = vunpack.c.l.b16 %v1893
        %v1906 = vunpack.c.l.b16 %v1894
        %v1907 = vunpack.c.l.b16 %v1895
        %v1908 = vunpack.c.h.b16 %v1893
        %v1909 = vunpack.c.h.b16 %v1894
        %v1910 = vunpack.c.h.b16 %v1895
        %v1911 = vunpack.c.l.b16 %v1896
        %v1912 = vunpack.c.l.b16 %v1897
        %v1913 = vunpack.c.l.b16 %v1898
        %v1914 = vunpack.c.h.b16 %v1896
        %v1915 = vunpack.c.h.b16 %v1897
        %v1916 = vunpack.c.h.b16 %v1898
        %v1917 = vpack.c.b16 %v1906, %v1905
        %v1918 = vpack.c.b16 %v1907, %v1907
        %v1919 = vpack.c.b16 %v1909, %v1908
        %v1920 = vpack.c.b16 %v1910, %v1910
        %v1921 = vpack.c.b16 %v1912, %v1911
        %v1922 = vpack.c.b16 %v1913, %v1913
        %v1923 = vpack.c.b16 %v1915, %v1914
        %v1924 = vpack.c.b16 %v1916, %v1916
        %1933 = vst [vmem:[#allocation2 + $0x60] sm:$0xff] %v1917
        %1934 = vst [vmem:[#allocation2 + $0x68] sm:$0xf] %v1918
        %1935 = vst [vmem:[#allocation2 + $0x6c] sm:$0xff] %v1919
        %1936 = vst [vmem:[#allocation2 + $0x74] sm:$0xf] %v1920
        %1937 = vst [vmem:[#allocation2 + $0x78] sm:$0xff] %v1921
        %1938 = vst [vmem:[#allocation2 + $0x80] sm:$0xf] %v1922
        %1939 = vst [vmem:[#allocation2 + $0x84] sm:$0xff] %v1923
        %1940 = vst [vmem:[#allocation2 + $0x8c] sm:$0xf] %v1924
        %1941 = vrot.lane.b32.xlu0 %v1672, 1
        %v1942 = vpop.permute.xlu0 %1941
        %1943 = vrot.lane.b32.xlu0 %v1675, 1
        %v1944 = vpop.permute.xlu0 %1943
        %1945 = vrot.lane.b32.xlu0 %v1678, 1
        %v1946 = vpop.permute.xlu0 %1945
        %1947 = vrot.lane.b32.xlu0 %v1681, 1
        %v1948 = vpop.permute.xlu0 %1947
        %1949 = vrot.lane.b32.xlu0 %v1673, 1
        %v1950 = vpop.permute.xlu0 %1949
        %1951 = vrot.lane.b32.xlu0 %v1676, 1
        %v1952 = vpop.permute.xlu0 %1951
        %1953 = vrot.lane.b32.xlu0 %v1679, 1
        %v1954 = vpop.permute.xlu0 %1953
        %1955 = vrot.lane.b32.xlu0 %v1682, 1
        %v1956 = vpop.permute.xlu0 %1955
        %1957 = vrot.lane.b32.xlu0 %v1674, 1
        %v1958 = vpop.permute.xlu0 %1957
        %1959 = vrot.lane.b32.xlu0 %v1677, 1
        %v1960 = vpop.permute.xlu0 %1959
        %1961 = vrot.lane.b32.xlu0 %v1680, 1
        %v1962 = vpop.permute.xlu0 %1961
        %1963 = vrot.lane.b32.xlu0 %v1683, 1
        %v1964 = vpop.permute.xlu0 %1963
        %vm1965 = vcmp.lt.s32.totalorder %v1709, 1
        %v1966 = vsel %vm1965, %v1950, %v1958
        %v1967 = vsel %vm1965, %v1952, %v1960
        %v1968 = vsel %vm1965, %v1954, %v1962
        %v1969 = vsel %vm1965, %v1956, %v1964
        %v1970 = vsel %vm1965, %v1942, %v1950
        %v1971 = vsel %vm1965, %v1944, %v1952
        %v1972 = vsel %vm1965, %v1946, %v1954
        %v1973 = vsel %vm1965, %v1948, %v1956
        %v1974 = vsel %vm1965, %v1958, %v1942
        %v1975 = vsel %vm1965, %v1960, %v1944
        %v1976 = vsel %vm1965, %v1962, %v1946
        %v1977 = vsel %vm1965, %v1964, %v1948
        %v1978 = vpack.c.bf16 %v1975, %v1974
        %v1979 = vpack.c.bf16 %v1971, %v1970
        %v1980 = vpack.c.bf16 %v1967, %v1966
        %v1981 = vpack.c.bf16 %v1977, %v1976
        %v1982 = vpack.c.bf16 %v1973, %v1972
        %v1983 = vpack.c.bf16 %v1969, %v1968
        %v1990 = vunpack.c.l.b16 %v1978
        %v1991 = vunpack.c.l.b16 %v1979
        %v1992 = vunpack.c.l.b16 %v1980
        %v1993 = vunpack.c.h.b16 %v1978
        %v1994 = vunpack.c.h.b16 %v1979
        %v1995 = vunpack.c.h.b16 %v1980
        %v1996 = vunpack.c.l.b16 %v1981
        %v1997 = vunpack.c.l.b16 %v1982
        %v1998 = vunpack.c.l.b16 %v1983
        %v1999 = vunpack.c.h.b16 %v1981
        %v2000 = vunpack.c.h.b16 %v1982
        %v2001 = vunpack.c.h.b16 %v1983
        %v2002 = vpack.c.b16 %v1991, %v1990
        %v2003 = vpack.c.b16 %v1992, %v1992
        %v2004 = vpack.c.b16 %v1994, %v1993
        %v2005 = vpack.c.b16 %v1995, %v1995
        %v2006 = vpack.c.b16 %v1997, %v1996
        %v2007 = vpack.c.b16 %v1998, %v1998
        %v2008 = vpack.c.b16 %v2000, %v1999
        %v2009 = vpack.c.b16 %v2001, %v2001
        %2018 = vst [vmem:[#allocation2 + $0x90] sm:$0xff] %v2002
        %2019 = vst [vmem:[#allocation2 + $0x98] sm:$0xf] %v2003
        %2020 = vst [vmem:[#allocation2 + $0x9c] sm:$0xff] %v2004
        %2021 = vst [vmem:[#allocation2 + $0xa4] sm:$0xf] %v2005
        %2022 = vst [vmem:[#allocation2 + $0xa8] sm:$0xff] %v2006
        %2023 = vst [vmem:[#allocation2 + $0xb0] sm:$0xf] %v2007
        %2024 = vst [vmem:[#allocation2 + $0xb4] sm:$0xff] %v2008
        %2025 = vst [vmem:[#allocation2 + $0xbc] sm:$0xf] %v2009
        %v2026 = vpack.c.bf16 %v1675, %v1672
        %v2027 = vpack.c.bf16 %v1676, %v1673
        %v2028 = vpack.c.bf16 %v1677, %v1674
        %v2029 = vpack.c.bf16 %v1681, %v1678
        %v2030 = vpack.c.bf16 %v1682, %v1679
        %v2031 = vpack.c.bf16 %v1683, %v1680
        %v2038 = vunpack.c.l.b16 %v2026
        %v2039 = vunpack.c.l.b16 %v2027
        %v2040 = vunpack.c.l.b16 %v2028
        %v2041 = vunpack.c.h.b16 %v2026
        %v2042 = vunpack.c.h.b16 %v2027
        %v2043 = vunpack.c.h.b16 %v2028
        %v2044 = vunpack.c.l.b16 %v2029
        %v2045 = vunpack.c.l.b16 %v2030
        %v2046 = vunpack.c.l.b16 %v2031
        %v2047 = vunpack.c.h.b16 %v2029
        %v2048 = vunpack.c.h.b16 %v2030
        %v2049 = vunpack.c.h.b16 %v2031
        %v2050 = vpack.c.b16 %v2039, %v2038
        %v2051 = vpack.c.b16 %v2040, %v2040
        %v2052 = vpack.c.b16 %v2042, %v2041
        %v2053 = vpack.c.b16 %v2043, %v2043
        %v2054 = vpack.c.b16 %v2045, %v2044
        %v2055 = vpack.c.b16 %v2046, %v2046
        %v2056 = vpack.c.b16 %v2048, %v2047
        %v2057 = vpack.c.b16 %v2049, %v2049
        %2066 = vst [vmem:[#allocation2 + $0xc0] sm:$0xff] %v2050
        %2067 = vst [vmem:[#allocation2 + $0xc8] sm:$0xf] %v2051
        %2068 = vst [vmem:[#allocation2 + $0xcc] sm:$0xff] %v2052
        %2069 = vst [vmem:[#allocation2 + $0xd4] sm:$0xf] %v2053
        %2070 = vst [vmem:[#allocation2 + $0xd8] sm:$0xff] %v2054
        %2071 = vst [vmem:[#allocation2 + $0xe0] sm:$0xf] %v2055
        %2072 = vst [vmem:[#allocation2 + $0xe4] sm:$0xff] %v2056
        %2073 = vst [vmem:[#allocation2 + $0xec] sm:$0xf] %v2057
        %2074 = vrot.lane.b32.xlu0 %v1672, 127
        %v2075 = vpop.permute.xlu0 %2074
        %2076 = vrot.lane.b32.xlu0 %v1675, 127
        %v2077 = vpop.permute.xlu0 %2076
        %2078 = vrot.lane.b32.xlu0 %v1678, 127
        %v2079 = vpop.permute.xlu0 %2078
        %2080 = vrot.lane.b32.xlu0 %v1681, 127
        %v2081 = vpop.permute.xlu0 %2080
        %2082 = vrot.lane.b32.xlu0 %v1673, 127
        %v2083 = vpop.permute.xlu0 %2082
        %2084 = vrot.lane.b32.xlu0 %v1676, 127
        %v2085 = vpop.permute.xlu0 %2084
        %2086 = vrot.lane.b32.xlu0 %v1679, 127
        %v2087 = vpop.permute.xlu0 %2086
        %2088 = vrot.lane.b32.xlu0 %v1682, 127
        %v2089 = vpop.permute.xlu0 %2088
        %2090 = vrot.lane.b32.xlu0 %v1674, 127
        %v2091 = vpop.permute.xlu0 %2090
        %2092 = vrot.lane.b32.xlu0 %v1677, 127
        %v2093 = vpop.permute.xlu0 %2092
        %2094 = vrot.lane.b32.xlu0 %v1680, 127
        %v2095 = vpop.permute.xlu0 %2094
        %2096 = vrot.lane.b32.xlu0 %v1683, 127
        %v2097 = vpop.permute.xlu0 %2096
        %vm2098 = vcmp.lt.s32.totalorder %v1709, 127
        %v2099 = vsel %vm2098, %v2083, %v2091
        %v2100 = vsel %vm2098, %v2085, %v2093
        %v2101 = vsel %vm2098, %v2087, %v2095
        %v2102 = vsel %vm2098, %v2089, %v2097
        %v2103 = vsel %vm2098, %v2075, %v2083
        %v2104 = vsel %vm2098, %v2077, %v2085
        %v2105 = vsel %vm2098, %v2079, %v2087
        %v2106 = vsel %vm2098, %v2081, %v2089
        %v2107 = vsel %vm2098, %v2091, %v2075
        %v2108 = vsel %vm2098, %v2093, %v2077
        %v2109 = vsel %vm2098, %v2095, %v2079
        %v2110 = vsel %vm2098, %v2097, %v2081
        %v2111 = vpack.c.bf16 %v2104, %v2103
        %v2112 = vpack.c.bf16 %v2100, %v2099
        %v2113 = vpack.c.bf16 %v2108, %v2107
        %v2114 = vpack.c.bf16 %v2106, %v2105
        %v2115 = vpack.c.bf16 %v2102, %v2101
        %v2116 = vpack.c.bf16 %v2110, %v2109
        %v2123 = vunpack.c.l.b16 %v2111
        %v2124 = vunpack.c.l.b16 %v2112
        %v2125 = vunpack.c.l.b16 %v2113
        %v2126 = vunpack.c.h.b16 %v2111
        %v2127 = vunpack.c.h.b16 %v2112
        %v2128 = vunpack.c.h.b16 %v2113
        %v2129 = vunpack.c.l.b16 %v2114
        %v2130 = vunpack.c.l.b16 %v2115
        %v2131 = vunpack.c.l.b16 %v2116
        %v2132 = vunpack.c.h.b16 %v2114
        %v2133 = vunpack.c.h.b16 %v2115
        %v2134 = vunpack.c.h.b16 %v2116
        %v2135 = vpack.c.b16 %v2124, %v2123
        %v2136 = vpack.c.b16 %v2125, %v2125
        %v2137 = vpack.c.b16 %v2127, %v2126
        %v2138 = vpack.c.b16 %v2128, %v2128
        %v2139 = vpack.c.b16 %v2130, %v2129
        %v2140 = vpack.c.b16 %v2131, %v2131
        %v2141 = vpack.c.b16 %v2133, %v2132
        %v2142 = vpack.c.b16 %v2134, %v2134
        %2151 = vst [vmem:[#allocation2 + $0xf0] sm:$0xff] %v2135
        %2152 = vst [vmem:[#allocation2 + $0xf8] sm:$0xf] %v2136
        %2153 = vst [vmem:[#allocation2 + $0xfc] sm:$0xff] %v2137
        %2154 = vst [vmem:[#allocation2 + $0x104] sm:$0xf] %v2138
        %2155 = vst [vmem:[#allocation2 + $0x108] sm:$0xff] %v2139
        %2156 = vst [vmem:[#allocation2 + $0x110] sm:$0xf] %v2140
        %2157 = vst [vmem:[#allocation2 + $0x114] sm:$0xff] %v2141
        %2158 = vst [vmem:[#allocation2 + $0x11c] sm:$0xf] %v2142
        %2159 = vrot.lane.b32.xlu0 %v1672, 111
        %v2160 = vpop.permute.xlu0 %2159
        %2161 = vrot.lane.b32.xlu0 %v1675, 111
        %v2162 = vpop.permute.xlu0 %2161
        %2163 = vrot.lane.b32.xlu0 %v1678, 111
        %v2164 = vpop.permute.xlu0 %2163
        %2165 = vrot.lane.b32.xlu0 %v1681, 111
        %v2166 = vpop.permute.xlu0 %2165
        %2167 = vrot.lane.b32.xlu0 %v1673, 111
        %v2168 = vpop.permute.xlu0 %2167
        %2169 = vrot.lane.b32.xlu0 %v1676, 111
        %v2170 = vpop.permute.xlu0 %2169
        %2171 = vrot.lane.b32.xlu0 %v1679, 111
        %v2172 = vpop.permute.xlu0 %2171
        %2173 = vrot.lane.b32.xlu0 %v1682, 111
        %v2174 = vpop.permute.xlu0 %2173
        %2175 = vrot.lane.b32.xlu0 %v1674, 111
        %v2176 = vpop.permute.xlu0 %2175
        %2177 = vrot.lane.b32.xlu0 %v1677, 111
        %v2178 = vpop.permute.xlu0 %2177
        %2179 = vrot.lane.b32.xlu0 %v1680, 111
        %v2180 = vpop.permute.xlu0 %2179
        %2181 = vrot.lane.b32.xlu0 %v1683, 111
        %v2182 = vpop.permute.xlu0 %2181
        %vm2183 = vcmp.lt.s32.totalorder %v1709, 111
        %v2184 = vsel %vm2183, %v2168, %v2176
        %v2185 = vsel %vm2183, %v2170, %v2178
        %v2186 = vsel %vm2183, %v2172, %v2180
        %v2187 = vsel %vm2183, %v2174, %v2182
        %v2188 = vsel %vm2183, %v2160, %v2168
        %v2189 = vsel %vm2183, %v2162, %v2170
        %v2190 = vsel %vm2183, %v2164, %v2172
        %v2191 = vsel %vm2183, %v2166, %v2174
        %v2192 = vsel %vm2183, %v2176, %v2160
        %v2193 = vsel %vm2183, %v2178, %v2162
        %v2194 = vsel %vm2183, %v2180, %v2164
        %v2195 = vsel %vm2183, %v2182, %v2166
        %v2196 = vpack.c.bf16 %v2189, %v2188
        %v2197 = vpack.c.bf16 %v2185, %v2184
        %v2198 = vpack.c.bf16 %v2193, %v2192
        %v2199 = vpack.c.bf16 %v2191, %v2190
        %v2200 = vpack.c.bf16 %v2187, %v2186
        %v2201 = vpack.c.bf16 %v2195, %v2194
        %v2208 = vunpack.c.l.b16 %v2196
        %v2209 = vunpack.c.l.b16 %v2197
        %v2210 = vunpack.c.l.b16 %v2198
        %v2211 = vunpack.c.h.b16 %v2196
        %v2212 = vunpack.c.h.b16 %v2197
        %v2213 = vunpack.c.h.b16 %v2198
        %v2214 = vunpack.c.l.b16 %v2199
        %v2215 = vunpack.c.l.b16 %v2200
        %v2216 = vunpack.c.l.b16 %v2201
        %v2217 = vunpack.c.h.b16 %v2199
        %v2218 = vunpack.c.h.b16 %v2200
        %v2219 = vunpack.c.h.b16 %v2201
        %v2220 = vpack.c.b16 %v2209, %v2208
        %v2221 = vpack.c.b16 %v2210, %v2210
        %v2222 = vpack.c.b16 %v2212, %v2211
        %v2223 = vpack.c.b16 %v2213, %v2213
        %v2224 = vpack.c.b16 %v2215, %v2214
        %v2225 = vpack.c.b16 %v2216, %v2216
        %v2226 = vpack.c.b16 %v2218, %v2217
        %v2227 = vpack.c.b16 %v2219, %v2219
        %2236 = vst [vmem:[#allocation2 + $0x120] sm:$0xff] %v2220
        %2237 = vst [vmem:[#allocation2 + $0x128] sm:$0xf] %v2221
        %2238 = vst [vmem:[#allocation2 + $0x12c] sm:$0xff] %v2222
        %2239 = vst [vmem:[#allocation2 + $0x134] sm:$0xf] %v2223
        %2240 = vst [vmem:[#allocation2 + $0x138] sm:$0xff] %v2224
        %2241 = vst [vmem:[#allocation2 + $0x140] sm:$0xf] %v2225
        %2242 = vst [vmem:[#allocation2 + $0x144] sm:$0xff] %v2226
        %2243 = vst [vmem:[#allocation2 + $0x14c] sm:$0xf] %v2227
        %2244 = vrot.lane.b32.xlu0 %v1672, 110
        %v2245 = vpop.permute.xlu0 %2244
        %2246 = vrot.lane.b32.xlu0 %v1675, 110
        %v2247 = vpop.permute.xlu0 %2246
        %2248 = vrot.lane.b32.xlu0 %v1678, 110
        %v2249 = vpop.permute.xlu0 %2248
        %2250 = vrot.lane.b32.xlu0 %v1681, 110
        %v2251 = vpop.permute.xlu0 %2250
        %2252 = vrot.lane.b32.xlu0 %v1673, 110
        %v2253 = vpop.permute.xlu0 %2252
        %2254 = vrot.lane.b32.xlu0 %v1676, 110
        %v2255 = vpop.permute.xlu0 %2254
        %2256 = vrot.lane.b32.xlu0 %v1679, 110
        %v2257 = vpop.permute.xlu0 %2256
        %2258 = vrot.lane.b32.xlu0 %v1682, 110
        %v2259 = vpop.permute.xlu0 %2258
        %2260 = vrot.lane.b32.xlu0 %v1674, 110
        %v2261 = vpop.permute.xlu0 %2260
        %2262 = vrot.lane.b32.xlu0 %v1677, 110
        %v2263 = vpop.permute.xlu0 %2262
        %2264 = vrot.lane.b32.xlu0 %v1680, 110
        %v2265 = vpop.permute.xlu0 %2264
        %2266 = vrot.lane.b32.xlu0 %v1683, 110
        %v2267 = vpop.permute.xlu0 %2266
        %vm2268 = vcmp.lt.s32.totalorder %v1709, 110
        %v2269 = vsel %vm2268, %v2253, %v2261
        %v2270 = vsel %vm2268, %v2255, %v2263
        %v2271 = vsel %vm2268, %v2257, %v2265
        %v2272 = vsel %vm2268, %v2259, %v2267
        %v2273 = vsel %vm2268, %v2245, %v2253
        %v2274 = vsel %vm2268, %v2247, %v2255
        %v2275 = vsel %vm2268, %v2249, %v2257
        %v2276 = vsel %vm2268, %v2251, %v2259
        %v2277 = vsel %vm2268, %v2261, %v2245
        %v2278 = vsel %vm2268, %v2263, %v2247
        %v2279 = vsel %vm2268, %v2265, %v2249
        %v2280 = vsel %vm2268, %v2267, %v2251
        %v2281 = vpack.c.bf16 %v2274, %v2273
        %v2282 = vpack.c.bf16 %v2270, %v2269
        %v2283 = vpack.c.bf16 %v2278, %v2277
        %v2284 = vpack.c.bf16 %v2276, %v2275
        %v2285 = vpack.c.bf16 %v2272, %v2271
        %v2286 = vpack.c.bf16 %v2280, %v2279
        %v2293 = vunpack.c.l.b16 %v2281
        %v2294 = vunpack.c.l.b16 %v2282
        %v2295 = vunpack.c.l.b16 %v2283
        %v2296 = vunpack.c.h.b16 %v2281
        %v2297 = vunpack.c.h.b16 %v2282
        %v2298 = vunpack.c.h.b16 %v2283
        %v2299 = vunpack.c.l.b16 %v2284
        %v2300 = vunpack.c.l.b16 %v2285
        %v2301 = vunpack.c.l.b16 %v2286
        %v2302 = vunpack.c.h.b16 %v2284
        %v2303 = vunpack.c.h.b16 %v2285
        %v2304 = vunpack.c.h.b16 %v2286
        %v2305 = vpack.c.b16 %v2294, %v2293
        %v2306 = vpack.c.b16 %v2295, %v2295
        %v2307 = vpack.c.b16 %v2297, %v2296
        %v2308 = vpack.c.b16 %v2298, %v2298
        %v2309 = vpack.c.b16 %v2300, %v2299
        %v2310 = vpack.c.b16 %v2301, %v2301
        %v2311 = vpack.c.b16 %v2303, %v2302
        %v2312 = vpack.c.b16 %v2304, %v2304
        %2321 = vst [vmem:[#allocation2 + $0x150] sm:$0xff] %v2305
        %2322 = vst [vmem:[#allocation2 + $0x158] sm:$0xf] %v2306
        %2323 = vst [vmem:[#allocation2 + $0x15c] sm:$0xff] %v2307
        %2324 = vst [vmem:[#allocation2 + $0x164] sm:$0xf] %v2308
        %2325 = vst [vmem:[#allocation2 + $0x168] sm:$0xff] %v2309
        %2326 = vst [vmem:[#allocation2 + $0x170] sm:$0xf] %v2310
        %2327 = vst [vmem:[#allocation2 + $0x174] sm:$0xff] %v2311
        %2328 = vst [vmem:[#allocation2 + $0x17c] sm:$0xf] %v2312
        %2329 = vrot.lane.b32.xlu0 %v1672, 109
        %v2330 = vpop.permute.xlu0 %2329
        %2331 = vrot.lane.b32.xlu0 %v1675, 109
        %v2332 = vpop.permute.xlu0 %2331
        %2333 = vrot.lane.b32.xlu0 %v1678, 109
        %v2334 = vpop.permute.xlu0 %2333
        %2335 = vrot.lane.b32.xlu0 %v1681, 109
        %v2336 = vpop.permute.xlu0 %2335
        %2337 = vrot.lane.b32.xlu0 %v1673, 109
        %v2338 = vpop.permute.xlu0 %2337
        %2339 = vrot.lane.b32.xlu0 %v1676, 109
        %v2340 = vpop.permute.xlu0 %2339
        %2341 = vrot.lane.b32.xlu0 %v1679, 109
        %v2342 = vpop.permute.xlu0 %2341
        %2343 = vrot.lane.b32.xlu0 %v1682, 109
        %v2344 = vpop.permute.xlu0 %2343
        %2345 = vrot.lane.b32.xlu0 %v1674, 109
        %v2346 = vpop.permute.xlu0 %2345
        %2347 = vrot.lane.b32.xlu0 %v1677, 109
        %v2348 = vpop.permute.xlu0 %2347
        %2349 = vrot.lane.b32.xlu0 %v1680, 109
        %v2350 = vpop.permute.xlu0 %2349
        %2351 = vrot.lane.b32.xlu0 %v1683, 109
        %v2352 = vpop.permute.xlu0 %2351
        %vm2353 = vcmp.lt.s32.totalorder %v1709, 109
        %v2354 = vsel %vm2353, %v2338, %v2346
        %v2355 = vsel %vm2353, %v2340, %v2348
        %v2356 = vsel %vm2353, %v2342, %v2350
        %v2357 = vsel %vm2353, %v2344, %v2352
        %v2358 = vsel %vm2353, %v2330, %v2338
        %v2359 = vsel %vm2353, %v2332, %v2340
        %v2360 = vsel %vm2353, %v2334, %v2342
        %v2361 = vsel %vm2353, %v2336, %v2344
        %v2362 = vsel %vm2353, %v2346, %v2330
        %v2363 = vsel %vm2353, %v2348, %v2332
        %v2364 = vsel %vm2353, %v2350, %v2334
        %v2365 = vsel %vm2353, %v2352, %v2336
        %v2366 = vpack.c.bf16 %v2359, %v2358
        %v2367 = vpack.c.bf16 %v2355, %v2354
        %v2368 = vpack.c.bf16 %v2363, %v2362
        %v2369 = vpack.c.bf16 %v2361, %v2360
        %v2370 = vpack.c.bf16 %v2357, %v2356
        %v2371 = vpack.c.bf16 %v2365, %v2364
        %v2378 = vunpack.c.l.b16 %v2366
        %v2379 = vunpack.c.l.b16 %v2367
        %v2380 = vunpack.c.l.b16 %v2368
        %v2381 = vunpack.c.h.b16 %v2366
        %v2382 = vunpack.c.h.b16 %v2367
        %v2383 = vunpack.c.h.b16 %v2368
        %v2384 = vunpack.c.l.b16 %v2369
        %v2385 = vunpack.c.l.b16 %v2370
        %v2386 = vunpack.c.l.b16 %v2371
        %v2387 = vunpack.c.h.b16 %v2369
        %v2388 = vunpack.c.h.b16 %v2370
        %v2389 = vunpack.c.h.b16 %v2371
        %v2390 = vpack.c.b16 %v2379, %v2378
        %v2391 = vpack.c.b16 %v2380, %v2380
        %v2392 = vpack.c.b16 %v2382, %v2381
        %v2393 = vpack.c.b16 %v2383, %v2383
        %v2394 = vpack.c.b16 %v2385, %v2384
        %v2395 = vpack.c.b16 %v2386, %v2386
        %v2396 = vpack.c.b16 %v2388, %v2387
        %v2397 = vpack.c.b16 %v2389, %v2389
        %2406 = vst [vmem:[#allocation2 + $0x180] sm:$0xff] %v2390
        %2407 = vst [vmem:[#allocation2 + $0x188] sm:$0xf] %v2391
        %2408 = vst [vmem:[#allocation2 + $0x18c] sm:$0xff] %v2392
        %2409 = vst [vmem:[#allocation2 + $0x194] sm:$0xf] %v2393
        %2410 = vst [vmem:[#allocation2 + $0x198] sm:$0xff] %v2394
        %2411 = vst [vmem:[#allocation2 + $0x1a0] sm:$0xf] %v2395
        %2412 = vst [vmem:[#allocation2 + $0x1a4] sm:$0xff] %v2396
        %2413 = vst [vmem:[#allocation2 + $0x1ac] sm:$0xf] %v2397
        %p2414 = scmp.eq.s32.totalorder %s30, 3
        // Predicated region
        $region41: #{tpu_custom_call.1} parent=31 // pred_check
          %p2415 = pneg %p2414
        $region42: #{tpu_custom_call.1} parent=31 // pred_check_branch
          %2417 = sbr.rel (%p2415) target = $region44
        $region43: #{tpu_custom_call.1} parent=31 // pred_region
          %2418 = vst [vmem:[%s235] sm:$0xff] %v1636
          %2419 = vst [vmem:[%s235 + $0x8] sm:$0xff] %v1637
          %2420 = vst [vmem:[%s235 + $0x10] sm:$0xff] %v1638
          %2421 = vst [vmem:[%s235 + $0x18] sm:$0xff] %v1639
          %2422 = vst [vmem:[%s235 + $0x20] sm:$0xff] %v1640
          %2423 = vst [vmem:[%s235 + $0x28] sm:$0xff] %v1641
          %2424 = vst [vmem:[%s235 + $0x30] sm:$0xff] %v1642
          %2425 = vst [vmem:[%s235 + $0x38] sm:$0xff] %v1643
          %2426 = vst [vmem:[%s235 + $0x40] sm:$0xff] %v1644
          %2427 = vst [vmem:[%s235 + $0x48] sm:$0xff] %v1645
          %2428 = vst [vmem:[%s235 + $0x50] sm:$0xff] %v1646
          %2429 = vst [vmem:[%s235 + $0x58] sm:$0xff] %v1647
          %2430 = vst [vmem:[%s242] sm:$0xff] %v1612
          %2431 = vst [vmem:[%s242 + $0x8] sm:$0xff] %v1613
          %2432 = vst [vmem:[%s242 + $0x10] sm:$0xff] %v1614
          %2433 = vst [vmem:[%s242 + $0x18] sm:$0xff] %v1615
          %2434 = vst [vmem:[%s242 + $0x20] sm:$0xff] %v1616
          %2435 = vst [vmem:[%s242 + $0x28] sm:$0xff] %v1617
          %2436 = vst [vmem:[%s242 + $0x30] sm:$0xff] %v1618
          %2437 = vst [vmem:[%s242 + $0x38] sm:$0xff] %v1619
          %2438 = vst [vmem:[%s242 + $0x40] sm:$0xff] %v1620
          %2439 = vst [vmem:[%s242 + $0x48] sm:$0xff] %v1621
          %2440 = vst [vmem:[%s242 + $0x50] sm:$0xff] %v1622
          %2441 = vst [vmem:[%s242 + $0x58] sm:$0xff] %v1623
        $region44: #{tpu_custom_call.1} parent=31 // pred_fallthru
          _
        %s2442 = sand.u32 %s115, 1
        %s2443 = scalar_lea.sflag [#allocation6], %s2442
        %s2444 = sand.u32 %s115, 1
        %s2445 = smul.addr %s2444, 96
        %s2446 = scalar_lea.vmem [#allocation7], %s2445
        %s2447 = sand.u32 %s141, 1
        %s2448 = scalar_lea.sflag [#allocation9], %s2447
        %s2449 = sand.u32 %s141, 1
        %s2450 = smul.addr %s2449, 96
        %s2451 = scalar_lea.vmem [#allocation8], %s2450
        // Predicated region
        $region45: #{tpu_custom_call.1} parent=31 // pred_check
          %p2452 = pneg %p125
        $region46: #{tpu_custom_call.1} parent=31 // pred_check_branch
          %2454 = sbr.rel (%p2452) target = $region48
        $region47: #{tpu_custom_call.1} parent=31 // pred_region
          %s2456 = ssub.s32 1536, 1536
          %2457 = vsyncadd %s2443, %s2456
          %s2458 = smul.addr %s29, 12
          %s2459 = smul.addr %s2458, 128
          %s2460 = scalar_lea.hbm %s3, %s2459
          %s2461 = sshll.u32 %s2446, 4
          %s2462 = int_to_ptr.vmem [resolvable:$true] %s2461
          %2467 = dma.vmem_to_hbm [thread:$0]  %s2462, 1536, %s2460, %s2443, 384, 384, 24
        $region48: #{tpu_custom_call.1} parent=31 // pred_fallthru
          _
        // Predicated region
        $region49: #{tpu_custom_call.1} parent=31 // pred_check
          %p2468 = pneg %p151
        $region50: #{tpu_custom_call.1} parent=31 // pred_check_branch
          %2470 = sbr.rel (%p2468) target = $region52
        $region51: #{tpu_custom_call.1} parent=31 // pred_region
          %s2472 = ssub.s32 1536, 1536
          %2473 = vsyncadd %s2448, %s2472
          %s2474 = smul.addr %s29, 12
          %s2475 = smul.addr %s2474, 128
          %s2476 = scalar_lea.hbm %s4, %s2475
          %s2477 = sshll.u32 %s2451, 4
          %s2478 = int_to_ptr.vmem [resolvable:$true] %s2477
          %2483 = dma.vmem_to_hbm [thread:$0]  %s2478, 1536, %s2476, %s2448, 384, 384, 24
        $region52: #{tpu_custom_call.1} parent=31 // pred_fallthru
          _
      $region32: #{tpu_custom_call.1} parent=5 // pred_fallthru
        _
      %p2484 = scmp.le.s32.totalorder 2, %s20
      // Predicated region
      $region53: #{tpu_custom_call.1} parent=5 // pred_check
        %p2485 = pneg %p2484
      $region54: #{tpu_custom_call.1} parent=5 // pred_check_branch
        %2487 = sbr.rel (%p2485) target = $region56
      $region55: #{tpu_custom_call.1} parent=5 // pred_region
        %s2488 = ssub.s32 %s20, 2
        // Predicated region
        $region57: #{tpu_custom_call.1} parent=55 // pred_check
          %p2489 = pneg %p131
        $region58: #{tpu_custom_call.1} parent=55 // pred_check_branch
          %2491 = sbr.rel (%p2489) target = $region60
        $region59: #{tpu_custom_call.1} parent=55 // pred_region
          %s2492 = sand.u32 %s116, 1
          %s2493 = scalar_lea.sflag [#allocation6], %s2492
          %s2494 = sand.u32 %s116, 1
          %s2495 = smul.addr %s2494, 96
          %s2496 = scalar_lea.vmem [#allocation7], %s2495
          %2497 = dma.done %s2493, 1536
        $region60: #{tpu_custom_call.1} parent=55 // pred_fallthru
          _
        // Predicated region
        $region61: #{tpu_custom_call.1} parent=55 // pred_check
          %p2498 = pneg %p157
        $region62: #{tpu_custom_call.1} parent=55 // pred_check_branch
          %2500 = sbr.rel (%p2498) target = $region64
        $region63: #{tpu_custom_call.1} parent=55 // pred_region
          %s2501 = sand.u32 %s142, 1
          %s2502 = scalar_lea.sflag [#allocation9], %s2501
          %s2503 = sand.u32 %s142, 1
          %s2504 = smul.addr %s2503, 96
          %s2505 = scalar_lea.vmem [#allocation8], %s2504
          %2506 = dma.done %s2502, 1536
        $region64: #{tpu_custom_call.1} parent=55 // pred_fallthru
          _
      $region56: #{tpu_custom_call.1} parent=5 // pred_fallthru
        _
    $region6: #{tpu_custom_call.1} parent=1 // loop_footer
      %s24 = sadd.s32 1, %s20
    $region7: #{tpu_custom_call.1} parent=1 // loop_footer_branch
      %19 = sbr.rel target = $region3
    $region8: #{tpu_custom_call.1} parent=1 // loop_exit
      _
    %2507 = vsyncpa [#allocation5], 1
    %s2508 = scalar_lea.sflag [#allocation5], 1
    %2509 = vsyncpa %s2508, 1
    %2510 = vsyncpa [#allocation6], 1
    %s2511 = scalar_lea.sflag [#allocation6], 1
    %2512 = vsyncpa %s2511, 1
    %2513 = vsyncpa [#allocation9], 1
    %s2514 = scalar_lea.sflag [#allocation9], 1
    %2515 = vsyncpa %s2514, 1

</llo_original>
